<compile_context>
chip_gen: v7x
topology: tpu7x:2x2x1
jax: 0.10.0
libtpu: 0.0.40
codegen_flags: <defaults>
</compile_context>

<pallas_src>
import functools

import numpy as np
import jax
import jax.numpy as jnp
from jax import lax
from jax.experimental import pallas as pl
from jax.experimental.pallas import tpu as pltpu


# --------------------------- host-side constants -----------------------------
def _pool_constants(H, W):
    """(8, H*W) f32: rows 0..3 = left/right/up/down neighbour-valid masks,
    row 4 = 1/count (count_include_pad=False), rows 5..7 padding (sublane=8)."""
    hw = H * W
    h = np.arange(hw) // W
    w = np.arange(hw) % W
    pc = np.zeros((8, hw), np.float32)
    pc[0] = (w != 0)          # left neighbour exists
    pc[1] = (w != W - 1)      # right neighbour exists
    pc[2] = (h != 0)          # upper row exists
    pc[3] = (h != H - 1)      # lower row exists
    rc = np.minimum(h + 1, H - 1) - np.maximum(h - 1, 0) + 1
    cc = np.minimum(w + 1, W - 1) - np.maximum(w - 1, 0) + 1
    pc[4] = 1.0 / (rc * cc)
    return jnp.asarray(pc)


def _fuse_params(w1, b1, w2, b2, c, group):
    """Fold both 1x1 convs + skips into one matrix/bias, then block-diagonalize
    for `group` images.  Pure jnp -> safe under jit with traced weights.

      s2 + s3 (minus pool) = (I + w2^T)(w1^T + I) x + (I + w2^T) b1 + b2
    """
    hp = lax.Precision.HIGHEST
    w1 = jnp.asarray(w1, jnp.float32)
    b1 = jnp.asarray(b1, jnp.float32).reshape(c, 1)
    w2 = jnp.asarray(w2, jnp.float32)
    b2 = jnp.asarray(b2, jnp.float32).reshape(c, 1)
    eye = jnp.eye(c, dtype=jnp.float32)
    a = eye + w2.T                                            # I + w2^T
    m = jnp.matmul(a, w1.T + eye, precision=hp)               # (C, C)
    d = jnp.matmul(a, b1, precision=hp) + b2                  # (C, 1)
    m_bd = jnp.kron(jnp.eye(group, dtype=jnp.float32), m)     # (G*C, G*C)
    d_bd = jnp.tile(d, (group, 1))                            # (G*C, 1)
    return m_bd, d_bd


def _num_tensorcores():
    """v7x has 2 TensorCores per chip; earlier generations have 1."""
    try:
        kind = jax.devices()[0].device_kind.lower()
    except Exception:
        return 1
    return 2 if ("v7" in kind or "tpu7" in kind) else 1


def _pick_batch_tile(n, image_bytes, num_cores=1,
                     target_bytes=2 << 20, min_split_bytes=512 << 10):
    """Images per grid step.

    * ONE grid step when total traffic is tiny (grid-step overhead ~0.35us
      dwarfs the DMA time): covers the single-TC v5e/v6e case and the small
      v7x test case.
    * Otherwise the largest divisor of n keeping the input block <= ~2 MiB
      (~85% of HBM roofline per measured tile table; in+out double-buffered
      fits v5e's 16 MiB scoped-VMEM default) while leaving >= num_cores grid
      steps so both v7x TensorCores get work under "parallel" semantics.
    """
    divisors = [d for d in range(1, n + 1) if n % d == 0]
    fits = [d for d in divisors if d * image_bytes <= target_bytes] or [1]
    if n * image_bytes <= min_split_bytes:
        return fits[-1]
    split = [d for d in fits if n // d >= num_cores]
    return (split or fits)[-1]


# --------------------------------- kernel ------------------------------------
def _a_cell_kernel(x_ref, m_ref, d_ref, pc_ref, o_ref, *, width, group_rows,
                   n_groups):
    # x_ref / o_ref block: (bt*C, H*W)  -- channels on sublanes, H*W on lanes.
    hw = x_ref.shape[-1]
    gc = group_rows                      # rows per matmul group (= G*C)

    # Loop-invariant loads, hoisted out of the group loop (traced once per
    # grid step; no per-image re-emission of broadcasts).
    m = m_ref[...]                       # (G*C, G*C) block-diag fused matrix
    d = d_ref[...]                       # (G*C, 1)   fused bias
    mask_l = pc_ref[0:1, :]              # (1, HW) neighbour-valid masks
    mask_r = pc_ref[1:2, :]
    mask_u = pc_ref[2:3, :]
    mask_dn = pc_ref[3:4, :]
    inv_cnt = pc_ref[4:5, :]             # (1, HW) 1/count map

    def process(start):
        x = x_ref[pl.ds(start, gc), :]   # (G*C, HW) slab, G images at once
        # Fused 1x1 convs + skips for G images in ONE MXU matmul.
        # (HIGH precision is not lowered by Mosaic; DEFAULT breaks 1e-4 tol.)
        z = jnp.dot(m, x, precision=lax.Precision.HIGHEST,
                    preferred_element_type=jnp.float32) + d
        # Separable 3x3 zero-padded sum via XLU lane rolls; lane wraparound
        # (image/row edges) is cancelled by the precomputed masks.
        left = pltpu.roll(x, 1, 1)                 # x[.., l-1]
        right = pltpu.roll(x, hw - 1, 1)           # x[.., l+1]
        row = x + mask_l * left + mask_r * right
        up = pltpu.roll(row, width, 1)             # row[.., l-W]
        down = pltpu.roll(row, hw - width, 1)      # row[.., l+W]
        pooled = (row + mask_u * up + mask_dn * down) * inv_cnt
        # TODO(synk): if a bundle dump ever shows sigmoid on the VALU divide
        # path, switch to exp(-t) + pl.reciprocal(approx=True) on the EUP.
        o_ref[pl.ds(start, gc), :] = x * jax.nn.sigmoid(z + pooled)

    if n_groups == 1:
        process(0)
    else:
        def body(gi, carry):
            process(pl.multiple_of(gi * gc, gc))
            return carry
        lax.fori_loop(0, n_groups, body, 0, unroll=n_groups <= 4)


# -------------------------------- wrapper ------------------------------------
def a_cell_forward(x_nchw, w1, b1, w2, b2, drop_prob=0.0):
    # TODO(synk): drop_path is training-only stochastic depth; eval mode assumed,
    # so drop_prob is accepted for signature fidelity but unused.
    # TODO(synk): the PyTorch module accepts an arbitrary genotype; this kernel
    # implements one fixed genotype (see header).
    del drop_prob
    n, c, h, w = x_nchw.shape
    hw = h * w
    # Free reshape: NCHW is channel-major already -> flat (N*C, H*W) slab.
    x2d = x_nchw.reshape(n * c, hw)

    image_bytes = c * hw * 4
    bt = _pick_batch_tile(n, image_bytes, _num_tensorcores())
    group = max(g for g in (4, 3, 2, 1) if bt % g == 0)   # images per matmul
    n_groups = bt // group
    gc = group * c

    m_bd, d_bd = _fuse_params(w1, b1, w2, b2, c, group)
    pconst = _pool_constants(h, w)

    kernel = functools.partial(_a_cell_kernel, width=w, group_rows=gc,
                               n_groups=n_groups)
    out2d = pl.pallas_call(
        kernel,
        out_shape=jax.ShapeDtypeStruct((n * c, hw), jnp.float32),
        grid=(n // bt,),
        in_specs=[
            pl.BlockSpec((bt * c, hw), lambda i: (i, 0)),
            pl.BlockSpec((gc, gc), lambda i: (0, 0)),
            pl.BlockSpec((gc, 1), lambda i: (0, 0)),
            pl.BlockSpec((8, hw), lambda i: (0, 0)),
        ],
        out_specs=pl.BlockSpec((bt * c, hw), lambda i: (i, 0)),
        compiler_params=pltpu.CompilerParams(
            dimension_semantics=("parallel",),
            vmem_limit_bytes=32 * 1024 * 1024),
    )(x2d, m_bd, d_bd, pconst)

    return out2d.reshape(n, c, h, w)


# ----------------------------- reference ------------------------------------
def _avg_pool_3x3_ref(x_nhwc):
    """AvgPool2d(3, stride=1, padding=1, count_include_pad=False), NHWC."""
    _n, h, w, _c = x_nhwc.shape
    xp = jnp.pad(x_nhwc, ((0, 0), (1, 1), (1, 1), (0, 0)))
    acc = jnp.zeros_like(x_nhwc)
    for dy in range(3):
        for dx in range(3):
            acc = acc + xp[:, dy:dy + h, dx:dx + w, :]
    ones = jnp.ones((1, h, w, 1), x_nhwc.dtype)
    onesp = jnp.pad(ones, ((0, 0), (1, 1), (1, 1), (0, 0)))
    cnt = jnp.zeros_like(ones)
    for dy in range(3):
        for dx in range(3):
            cnt = cnt + onesp[:, dy:dy + h, dx:dx + w, :]
    return acc / cnt


def _reference(x_nchw, w1, b1, w2, b2):
    """Pure-JAX, unfused forward of the same module (high-precision matmuls)."""
    hp = lax.Precision.HIGHEST
    x = jnp.transpose(x_nchw, (0, 2, 3, 1))                        # NHWC
    h1 = jnp.einsum('nhwc,cd->nhwd', x, w1, precision=hp) + b1     # conv_1x1 #1
    s2 = h1 + x                                                    # + skip
    h1b = jnp.einsum('nhwc,cd->nhwd', s2, w2, precision=hp) + b2   # conv_1x1 #2
    s3 = h1b + _avg_pool_3x3_ref(x)                                # + avg_pool
    mask = jax.nn.sigmoid(s2 + s3)
    return jnp.transpose(x * mask, (0, 3, 1, 2))                   # NCHW


if __name__ == "__main__":
    N, C, H, W = 4, 32, 16, 16
    key = jax.random.PRNGKey(0)
    kx, kw1, kb1, kw2, kb2 = jax.random.split(key, 5)

    x = jax.random.normal(kx, (N, C, H, W), dtype=jnp.float32)       # NCHW
    w1 = jax.random.normal(kw1, (C, C), dtype=jnp.float32) * 0.1     # (C_in, C_out)
    b1 = jax.random.normal(kb1, (C,), dtype=jnp.float32) * 0.1
    w2 = jax.random.normal(kw2, (C, C), dtype=jnp.float32) * 0.1
    b2 = jax.random.normal(kb2, (C,), dtype=jnp.float32) * 0.1

    out = jax.block_until_ready(a_cell_forward(x, w1, b1, w2, b2, drop_prob=0.0))
    ref = jax.block_until_ready(_reference(x, w1, b1, w2, b2))

    assert out.shape == (N, C, H, W)
    max_err = float(jnp.max(jnp.abs(out - ref)))
    assert jnp.allclose(out, ref, atol=1e-4, rtol=1e-4), f"max abs err = {max_err}"
    print("KERNEL_OK")
</pallas_src>

<mosaic_0001>
module attributes {stable_mosaic.version = 11 : i64} {
  func.func @_a_cell_kernel(%arg0: i32, %arg1: memref<128x256xf32, #tpu.memory_space<vmem>>, %arg2: memref<128x128xf32, #tpu.memory_space<vmem>>, %arg3: memref<128x1xf32, #tpu.memory_space<vmem>>, %arg4: memref<8x256xf32, #tpu.memory_space<vmem>>, %arg5: memref<128x256xf32, #tpu.memory_space<vmem>>) attributes {dimension_semantics = [#tpu.dimension_semantics<parallel>], iteration_bounds = array<i64: 1>, scalar_prefetch = 0 : i64, scratch_operands = 0 : i64, tpu.core_type = #tpu.core_type<tc>, window_params = [{transform_indices = @transform_0, window_bounds = array<i64: 128, 256>}, {pipeline_mode = #tpu.pipeline_mode<synchronous>, transform_indices = @transform_1, window_bounds = array<i64: 128, 128>}, {pipeline_mode = #tpu.pipeline_mode<synchronous>, transform_indices = @transform_2, window_bounds = array<i64: 128, 1>}, {pipeline_mode = #tpu.pipeline_mode<synchronous>, transform_indices = @transform_3, window_bounds = array<i64: 8, 256>}, {transform_indices = @transform_4, window_bounds = array<i64: 128, 256>}]} {
    %c0 = arith.constant 0 : index
    %c0_0 = arith.constant 0 : index
    %0 = vector.load %arg2[%c0, %c0_0] : memref<128x128xf32, #tpu.memory_space<vmem>>, vector<128x128xf32>
    %c0_1 = arith.constant 0 : index
    %c0_2 = arith.constant 0 : index
    %1 = vector.load %arg3[%c0_1, %c0_2] : memref<128x1xf32, #tpu.memory_space<vmem>>, vector<128x1xf32>
    %c0_3 = arith.constant 0 : index
    %c0_4 = arith.constant 0 : index
    %2 = vector.load %arg4[%c0_3, %c0_4] : memref<8x256xf32, #tpu.memory_space<vmem>>, vector<1x256xf32>
    %c1 = arith.constant 1 : index
    %c0_5 = arith.constant 0 : index
    %3 = vector.load %arg4[%c1, %c0_5] : memref<8x256xf32, #tpu.memory_space<vmem>>, vector<1x256xf32>
    %c2 = arith.constant 2 : index
    %c0_6 = arith.constant 0 : index
    %4 = vector.load %arg4[%c2, %c0_6] : memref<8x256xf32, #tpu.memory_space<vmem>>, vector<1x256xf32>
    %c3 = arith.constant 3 : index
    %c0_7 = arith.constant 0 : index
    %5 = vector.load %arg4[%c3, %c0_7] : memref<8x256xf32, #tpu.memory_space<vmem>>, vector<1x256xf32>
    %c4 = arith.constant 4 : index
    %c0_8 = arith.constant 0 : index
    %6 = vector.load %arg4[%c4, %c0_8] : memref<8x256xf32, #tpu.memory_space<vmem>>, vector<1x256xf32>
    %c0_9 = arith.constant 0 : index
    %c0_10 = arith.constant 0 : index
    %7 = vector.load %arg1[%c0_9, %c0_10] : memref<128x256xf32, #tpu.memory_space<vmem>>, vector<128x256xf32>
    %cst = arith.constant dense<0.000000e+00> : vector<128x256xf32>
    %8 = tpu.matmul %0, %7, %cst {dimension_numbers = #tpu.dot_dimension_numbers<[1], [0], [0], [1], [0, 0, 1, 1], [], []>, precision = #tpu.contract_precision<fp32>} : vector<128x128xf32>, vector<128x256xf32>, vector<128x256xf32> -> vector<128x256xf32>
    %9 = vector.broadcast %1 : vector<128x1xf32> to vector<128x256xf32>
    %10 = arith.addf %8, %9 : vector<128x256xf32>
    %c1_i32 = arith.constant 1 : i32
    %11 = tpu.dynamic_rotate %7 by %c1_i32 dim 1 : vector<128x256xf32>, i32 -> vector<128x256xf32>
    %c255_i32 = arith.constant 255 : i32
    %12 = tpu.dynamic_rotate %7 by %c255_i32 dim 1 : vector<128x256xf32>, i32 -> vector<128x256xf32>
    %13 = vector.broadcast %2 : vector<1x256xf32> to vector<128x256xf32>
    %14 = arith.mulf %13, %11 : vector<128x256xf32>
    %15 = arith.addf %7, %14 : vector<128x256xf32>
    %16 = vector.broadcast %3 : vector<1x256xf32> to vector<128x256xf32>
    %17 = arith.mulf %16, %12 : vector<128x256xf32>
    %18 = arith.addf %15, %17 : vector<128x256xf32>
    %c16_i32 = arith.constant 16 : i32
    %19 = tpu.dynamic_rotate %18 by %c16_i32 dim 1 : vector<128x256xf32>, i32 -> vector<128x256xf32>
    %c240_i32 = arith.constant 240 : i32
    %20 = tpu.dynamic_rotate %18 by %c240_i32 dim 1 : vector<128x256xf32>, i32 -> vector<128x256xf32>
    %21 = vector.broadcast %4 : vector<1x256xf32> to vector<128x256xf32>
    %22 = arith.mulf %21, %19 : vector<128x256xf32>
    %23 = arith.addf %18, %22 : vector<128x256xf32>
    %24 = vector.broadcast %5 : vector<1x256xf32> to vector<128x256xf32>
    %25 = arith.mulf %24, %20 : vector<128x256xf32>
    %26 = arith.addf %23, %25 : vector<128x256xf32>
    %27 = vector.broadcast %6 : vector<1x256xf32> to vector<128x256xf32>
    %28 = arith.mulf %26, %27 : vector<128x256xf32>
    %29 = arith.addf %10, %28 : vector<128x256xf32>
    %30 = arith.negf %29 : vector<128x256xf32>
    %31 = math.exp %30 : vector<128x256xf32>
    %cst_11 = arith.constant 1.000000e+00 : f32
    %32 = vector.broadcast %cst_11 : f32 to vector<128x256xf32>
    %33 = arith.addf %32, %31 : vector<128x256xf32>
    %34 = arith.divf %32, %33 : vector<128x256xf32>
    %35 = arith.mulf %7, %34 : vector<128x256xf32>
    %c0_12 = arith.constant 0 : index
    %c0_13 = arith.constant 0 : index
    %36 = vector.load %arg5[%c0_12, %c0_13] : memref<128x256xf32, #tpu.memory_space<vmem>>, vector<128x256xf32>
    tpu.vector_store %arg5[%c0_12, %c0_13], %35 {strides = array<i32>} : memref<128x256xf32, #tpu.memory_space<vmem>>, vector<128x256xf32>,
    return
  }
  func.func @transform_0(%arg0: i32) -> (i32, i32) {
    %c0_i32 = arith.constant 0 : i32
    %c0_i32_0 = arith.constant 0 : i32
    return %arg0, %c0_i32 : i32, i32
  }
  func.func @transform_1(%arg0: i32) -> (i32, i32) {
    %c0_i32 = arith.constant 0 : i32
    %c0_i32_0 = arith.constant 0 : i32
    %c0_i32_1 = arith.constant 0 : i32
    return %c0_i32, %c0_i32_0 : i32, i32
  }
  func.func @transform_2(%arg0: i32) -> (i32, i32) {
    %c0_i32 = arith.constant 0 : i32
    %c0_i32_0 = arith.constant 0 : i32
    %c0_i32_1 = arith.constant 0 : i32
    return %c0_i32, %c0_i32_0 : i32, i32
  }
  func.func @transform_3(%arg0: i32) -> (i32, i32) {
    %c0_i32 = arith.constant 0 : i32
    %c0_i32_0 = arith.constant 0 : i32
    %c0_i32_1 = arith.constant 0 : i32
    return %c0_i32, %c0_i32_0 : i32, i32
  }
  func.func @transform_4(%arg0: i32) -> (i32, i32) {
    %c0_i32 = arith.constant 0 : i32
    %c0_i32_0 = arith.constant 0 : i32
    return %arg0, %c0_i32 : i32, i32
  }
}

</mosaic_0001>

<llo_original>
// kernel: tpu_custom_call.1
$region0: #{tpu_custom_call.1}
  #allocation0 [shape = 'u32[]', space=smem, size = 0x4, offset = 0x4, fixed_abs, tag = 'smem constant byte address 0x4 - core index']
  #allocation1 [shape = 'u32[144,128]{1,0:T(1,128)}', space=vmem, size = 0x12000, scoped, tag = 'internal scratch']
  %s0 = inlined_call_operand.hbm [shape: f32[128,256], index: 0, kind: input, shape index: {}]
  %s1 = inlined_call_operand.vmem [shape: f32[128,128], index: 1, kind: input, shape index: {}]
  %s2 = inlined_call_operand.vmem [shape: f32[128,1], index: 2, kind: input, shape index: {}]
  %s3 = inlined_call_operand.hbm [shape: f32[8,256], index: 3, kind: input, shape index: {}]
  %s4 = inlined_call_operand.hbm [shape: f32[128,256], index: 4, kind: output, shape index: {}]
  %s5 = sld [smem:[#allocation0]]
  $region34: #{tpu_custom_call.1} parent=0
    _
  %s7 = ssub.s32 1, %s5
  %s8 = scalar_select 0, %s7, %s5
  $region1: #{tpu_custom_call.1} parent=0
    #allocation2 [shape = 'u8[131072]{0}', space=vmem, size = 0x20000, scoped, tag = 'input window, operand 0, single buffered']
    #allocation3 [shape = 's32[1]{0}', space=sflag, size = 0x4, scoped, tag = 'scoped memory for tpu_custom_call.1']
    #allocation4 [shape = 's32[1]{0}', space=sflag, size = 0x4, scoped, tag = 'scoped memory for tpu_custom_call.1']
    #allocation5 [shape = 'u8[8192]{0}', space=vmem, size = 0x2000, scoped, tag = 'input window, operand 3, single buffered']
    #allocation6 [shape = 's32[1]{0}', space=sflag, size = 0x4, scoped, tag = 'scoped memory for tpu_custom_call.1']
    #allocation7 [shape = 'u8[131072]{0}', space=vmem, size = 0x20000, scoped, tag = 'output window, operand 0, single buffered']
    %9 = vsyncpa [#allocation3], 0
    %10 = vsyncpa [#allocation6], 0
    %11 = vsyncpa [#allocation4], 0
    // Predicated region
    $region2: #{tpu_custom_call.1} parent=1 // pred_check
      _
    $region3: #{tpu_custom_call.1} parent=1 // pred_check_branch
      %13 = sbr.rel (0) target = $region5
    $region4: #{tpu_custom_call.1} parent=1 // pred_region
      %s15 = ssub.s32 4096, 4096
      %16 = vsyncadd [#allocation3], %s15
      %s17 = sshll.u32 [#allocation2], 4
      %s18 = int_to_ptr.vmem [resolvable:$true] %s17
      %23 = dma.hbm_to_vmem [thread:$0]  %s0, 4096, %s18, [#allocation3], 256, 256, 16
    $region5: #{tpu_custom_call.1} parent=1 // pred_fallthru
      _
    // Predicated region
    $region6: #{tpu_custom_call.1} parent=1 // pred_check
      _
    $region7: #{tpu_custom_call.1} parent=1 // pred_check_branch
      %25 = sbr.rel (0) target = $region9
    $region8: #{tpu_custom_call.1} parent=1 // pred_region
      _
    $region9: #{tpu_custom_call.1} parent=1 // pred_fallthru
      _
    // Predicated region
    $region10: #{tpu_custom_call.1} parent=1 // pred_check
      _
    $region11: #{tpu_custom_call.1} parent=1 // pred_check_branch
      %27 = sbr.rel (0) target = $region13
    $region12: #{tpu_custom_call.1} parent=1 // pred_region
      _
    $region13: #{tpu_custom_call.1} parent=1 // pred_fallthru
      _
    // Predicated region
    $region14: #{tpu_custom_call.1} parent=1 // pred_check
      _
    $region15: #{tpu_custom_call.1} parent=1 // pred_check_branch
      %29 = sbr.rel (0) target = $region17
    $region16: #{tpu_custom_call.1} parent=1 // pred_region
      %s31 = ssub.s32 256, 256
      %32 = vsyncadd [#allocation6], %s31
      %s34 = sshll.u32 [#allocation5], 4
      %s35 = int_to_ptr.vmem [resolvable:$true] %s34
      %37 = dma.hbm_to_vmem [thread:$0]  %s3, 256, %s35, [#allocation6]
    $region17: #{tpu_custom_call.1} parent=1 // pred_fallthru
      _
    // Predicated region
    $region18: #{tpu_custom_call.1} parent=1 // pred_check
      _
    $region19: #{tpu_custom_call.1} parent=1 // pred_check_branch
      %39 = sbr.rel (0) target = $region21
    $region20: #{tpu_custom_call.1} parent=1 // pred_region
      %40 = dma.done [#allocation3], 4096
    $region21: #{tpu_custom_call.1} parent=1 // pred_fallthru
      _
    // Predicated region
    $region22: #{tpu_custom_call.1} parent=1 // pred_check
      _
    $region23: #{tpu_custom_call.1} parent=1 // pred_check_branch
      %42 = sbr.rel (0) target = $region25
    $region24: #{tpu_custom_call.1} parent=1 // pred_region
      %43 = dma.done [#allocation6], 256
    $region25: #{tpu_custom_call.1} parent=1 // pred_fallthru
      _
    %v44 = vld [vmem:[%s1] sm:$0xff]
    %v45 = vld [vmem:[%s1 + $0x8] sm:$0xff]
    %v46 = vld [vmem:[%s1 + $0x10] sm:$0xff]
    %v47 = vld [vmem:[%s1 + $0x18] sm:$0xff]
    %v48 = vld [vmem:[%s1 + $0x20] sm:$0xff]
    %v49 = vld [vmem:[%s1 + $0x28] sm:$0xff]
    %v50 = vld [vmem:[%s1 + $0x30] sm:$0xff]
    %v51 = vld [vmem:[%s1 + $0x38] sm:$0xff]
    %v52 = vld [vmem:[%s1 + $0x40] sm:$0xff]
    %v53 = vld [vmem:[%s1 + $0x48] sm:$0xff]
    %v54 = vld [vmem:[%s1 + $0x50] sm:$0xff]
    %v55 = vld [vmem:[%s1 + $0x58] sm:$0xff]
    %v56 = vld [vmem:[%s1 + $0x60] sm:$0xff]
    %v57 = vld [vmem:[%s1 + $0x68] sm:$0xff]
    %v58 = vld [vmem:[%s1 + $0x70] sm:$0xff]
    %v59 = vld [vmem:[%s1 + $0x78] sm:$0xff]
    %v60 = vld [vmem:[%s2] sm:$0xff]
    %v61 = vld [vmem:[%s2 + $0x8] sm:$0xff]
    %v62 = vld [vmem:[%s2 + $0x10] sm:$0xff]
    %v63 = vld [vmem:[%s2 + $0x18] sm:$0xff]
    %v64 = vld [vmem:[%s2 + $0x20] sm:$0xff]
    %v65 = vld [vmem:[%s2 + $0x28] sm:$0xff]
    %v66 = vld [vmem:[%s2 + $0x30] sm:$0xff]
    %v67 = vld [vmem:[%s2 + $0x38] sm:$0xff]
    %v68 = vld [vmem:[%s2 + $0x40] sm:$0xff]
    %v69 = vld [vmem:[%s2 + $0x48] sm:$0xff]
    %v70 = vld [vmem:[%s2 + $0x50] sm:$0xff]
    %v71 = vld [vmem:[%s2 + $0x58] sm:$0xff]
    %v72 = vld [vmem:[%s2 + $0x60] sm:$0xff]
    %v73 = vld [vmem:[%s2 + $0x68] sm:$0xff]
    %v74 = vld [vmem:[%s2 + $0x70] sm:$0xff]
    %v75 = vld [vmem:[%s2 + $0x78] sm:$0xff]
    %v76 = vld [vmem:[#allocation5] ss:$8 sm:$0x3]
    %s77 = scalar_lea.vmem [#allocation5], 1
    %v78 = vld [vmem:[%s77] ss:$8 sm:$0x3]
    %s79 = scalar_lea.vmem [#allocation5], 2
    %v80 = vld [vmem:[%s79] ss:$8 sm:$0x3]
    %s81 = scalar_lea.vmem [#allocation5], 3
    %v82 = vld [vmem:[%s81] ss:$8 sm:$0x3]
    %s83 = scalar_lea.vmem [#allocation5], 4
    %v84 = vld [vmem:[%s83] ss:$8 sm:$0x3]
    %v85 = vld [vmem:[#allocation2] sm:$0xff]
    %v86 = vld [vmem:[#allocation2 + $0x8] sm:$0xff]
    %v87 = vld [vmem:[#allocation2 + $0x10] sm:$0xff]
    %v88 = vld [vmem:[#allocation2 + $0x18] sm:$0xff]
    %v89 = vld [vmem:[#allocation2 + $0x20] sm:$0xff]
    %v90 = vld [vmem:[#allocation2 + $0x28] sm:$0xff]
    %v91 = vld [vmem:[#allocation2 + $0x30] sm:$0xff]
    %v92 = vld [vmem:[#allocation2 + $0x38] sm:$0xff]
    %v93 = vld [vmem:[#allocation2 + $0x40] sm:$0xff]
    %v94 = vld [vmem:[#allocation2 + $0x48] sm:$0xff]
    %v95 = vld [vmem:[#allocation2 + $0x50] sm:$0xff]
    %v96 = vld [vmem:[#allocation2 + $0x58] sm:$0xff]
    %v97 = vld [vmem:[#allocation2 + $0x60] sm:$0xff]
    %v98 = vld [vmem:[#allocation2 + $0x68] sm:$0xff]
    %v99 = vld [vmem:[#allocation2 + $0x70] sm:$0xff]
    %v100 = vld [vmem:[#allocation2 + $0x78] sm:$0xff]
    %v101 = vld [vmem:[#allocation2 + $0x80] sm:$0xff]
    %v102 = vld [vmem:[#allocation2 + $0x88] sm:$0xff]
    %v103 = vld [vmem:[#allocation2 + $0x90] sm:$0xff]
    %v104 = vld [vmem:[#allocation2 + $0x98] sm:$0xff]
    %v105 = vld [vmem:[#allocation2 + $0xa0] sm:$0xff]
    %v106 = vld [vmem:[#allocation2 + $0xa8] sm:$0xff]
    %v107 = vld [vmem:[#allocation2 + $0xb0] sm:$0xff]
    %v108 = vld [vmem:[#allocation2 + $0xb8] sm:$0xff]
    %v109 = vld [vmem:[#allocation2 + $0xc0] sm:$0xff]
    %v110 = vld [vmem:[#allocation2 + $0xc8] sm:$0xff]
    %v111 = vld [vmem:[#allocation2 + $0xd0] sm:$0xff]
    %v112 = vld [vmem:[#allocation2 + $0xd8] sm:$0xff]
    %v113 = vld [vmem:[#allocation2 + $0xe0] sm:$0xff]
    %v114 = vld [vmem:[#allocation2 + $0xe8] sm:$0xff]
    %v115 = vld [vmem:[#allocation2 + $0xf0] sm:$0xff]
    %v116 = vld [vmem:[#allocation2 + $0xf8] sm:$0xff]
    %118 = vset.pattern.permute.xlu0 0
    %119 = vperm.xlu0 %118, %v60
    %v120 = vpop.permute.xlu0 %119
    %123 = vset.pattern.permute.xlu0 0
    %124 = vperm.xlu0 %123, %v61
    %v125 = vpop.permute.xlu0 %124
    %128 = vset.pattern.permute.xlu0 0
    %129 = vperm.xlu0 %128, %v62
    %v130 = vpop.permute.xlu0 %129
    %133 = vset.pattern.permute.xlu0 0
    %134 = vperm.xlu0 %133, %v63
    %v135 = vpop.permute.xlu0 %134
    %138 = vset.pattern.permute.xlu0 0
    %139 = vperm.xlu0 %138, %v64
    %v140 = vpop.permute.xlu0 %139
    %143 = vset.pattern.permute.xlu0 0
    %144 = vperm.xlu0 %143, %v65
    %v145 = vpop.permute.xlu0 %144
    %148 = vset.pattern.permute.xlu0 0
    %149 = vperm.xlu0 %148, %v66
    %v150 = vpop.permute.xlu0 %149
    %153 = vset.pattern.permute.xlu0 0
    %154 = vperm.xlu0 %153, %v67
    %v155 = vpop.permute.xlu0 %154
    %158 = vset.pattern.permute.xlu0 0
    %159 = vperm.xlu0 %158, %v68
    %v160 = vpop.permute.xlu0 %159
    %163 = vset.pattern.permute.xlu0 0
    %164 = vperm.xlu0 %163, %v69
    %v165 = vpop.permute.xlu0 %164
    %168 = vset.pattern.permute.xlu0 0
    %169 = vperm.xlu0 %168, %v70
    %v170 = vpop.permute.xlu0 %169
    %173 = vset.pattern.permute.xlu0 0
    %174 = vperm.xlu0 %173, %v71
    %v175 = vpop.permute.xlu0 %174
    %178 = vset.pattern.permute.xlu0 0
    %179 = vperm.xlu0 %178, %v72
    %v180 = vpop.permute.xlu0 %179
    %183 = vset.pattern.permute.xlu0 0
    %184 = vperm.xlu0 %183, %v73
    %v185 = vpop.permute.xlu0 %184
    %188 = vset.pattern.permute.xlu0 0
    %189 = vperm.xlu0 %188, %v74
    %v190 = vpop.permute.xlu0 %189
    %193 = vset.pattern.permute.xlu0 0
    %194 = vperm.xlu0 %193, %v75
    %v195 = vpop.permute.xlu0 %194
    %v197 = vand.u32 %v86, 4294901760
    %198 = vmatprep.subr.mxu0 %v197
    %v199 = vand.u32 %v85, 4294901760
    %200 = vmatpush1.msra.mxu0 %v199
    %v201 = vand.u32 %v88, 4294901760
    %202 = vmatprep.subr.mxu0 %v201
    %v203 = vand.u32 %v87, 4294901760
    %204 = vmatpush1.msra.mxu0 %v203
    %v205 = vand.u32 %v90, 4294901760
    %206 = vmatprep.subr.mxu0 %v205
    %v207 = vand.u32 %v89, 4294901760
    %208 = vmatpush1.msra.mxu0 %v207
    %v209 = vand.u32 %v92, 4294901760
    %210 = vmatprep.subr.mxu0 %v209
    %v211 = vand.u32 %v91, 4294901760
    %212 = vmatpush1.msra.mxu0 %v211
    %v213 = vand.u32 %v94, 4294901760
    %214 = vmatprep.subr.mxu0 %v213
    %v215 = vand.u32 %v93, 4294901760
    %216 = vmatpush1.msra.mxu0 %v215
    %v217 = vand.u32 %v96, 4294901760
    %218 = vmatprep.subr.mxu0 %v217
    %v219 = vand.u32 %v95, 4294901760
    %220 = vmatpush1.msra.mxu0 %v219
    %v221 = vand.u32 %v98, 4294901760
    %222 = vmatprep.subr.mxu0 %v221
    %v223 = vand.u32 %v97, 4294901760
    %224 = vmatpush1.msra.mxu0 %v223
    %v225 = vand.u32 %v100, 4294901760
    %226 = vmatprep.subr.mxu0 %v225
    %v227 = vand.u32 %v99, 4294901760
    %228 = vmatpush1.msra.mxu0 %v227
    %v229 = vand.u32 %v102, 4294901760
    %230 = vmatprep.subr.mxu0 %v229
    %v231 = vand.u32 %v101, 4294901760
    %232 = vmatpush1.msra.mxu0 %v231
    %v233 = vand.u32 %v104, 4294901760
    %234 = vmatprep.subr.mxu0 %v233
    %v235 = vand.u32 %v103, 4294901760
    %236 = vmatpush1.msra.mxu0 %v235
    %v237 = vand.u32 %v106, 4294901760
    %238 = vmatprep.subr.mxu0 %v237
    %v239 = vand.u32 %v105, 4294901760
    %240 = vmatpush1.msra.mxu0 %v239
    %v241 = vand.u32 %v108, 4294901760
    %242 = vmatprep.subr.mxu0 %v241
    %v243 = vand.u32 %v107, 4294901760
    %244 = vmatpush1.msra.mxu0 %v243
    %v245 = vand.u32 %v110, 4294901760
    %246 = vmatprep.subr.mxu0 %v245
    %v247 = vand.u32 %v109, 4294901760
    %248 = vmatpush1.msra.mxu0 %v247
    %v249 = vand.u32 %v112, 4294901760
    %250 = vmatprep.subr.mxu0 %v249
    %v251 = vand.u32 %v111, 4294901760
    %252 = vmatpush1.msra.mxu0 %v251
    %v253 = vand.u32 %v114, 4294901760
    %254 = vmatprep.subr.mxu0 %v253
    %v255 = vand.u32 %v113, 4294901760
    %256 = vmatpush1.msra.mxu0 %v255
    %v257 = vand.u32 %v116, 4294901760
    %258 = vmatprep.subr.mxu0 %v257
    %v259 = vand.u32 %v115, 4294901760
    %260 = vmatpush1.msra.mxu0 %v259
    %261 = vmatprep.subr.mxu0 0.0
    %262 = vmatpush1.msra.mxu0 0.0
    %263 = vmatprep.subr.mxu0 0.0
    %264 = vmatpush1.msra.mxu0 0.0
    %265 = vmatprep.subr.mxu0 0.0
    %266 = vmatpush1.msra.mxu0 0.0
    %267 = vmatprep.subr.mxu0 0.0
    %268 = vmatpush1.msra.mxu0 0.0
    %269 = vmatprep.subr.mxu0 0.0
    %270 = vmatpush1.msra.mxu0 0.0
    %271 = vmatprep.subr.mxu0 0.0
    %272 = vmatpush1.msra.mxu0 0.0
    %273 = vmatprep.subr.mxu0 0.0
    %274 = vmatpush1.msra.mxu0 0.0
    %275 = vmatprep.subr.mxu0 0.0
    %276 = vmatpush1.msra.mxu0 0.0
    %277 = vmatprep.subr.mxu0 0.0
    %278 = vmatpush1.msra.mxu0 0.0
    %279 = vmatprep.subr.mxu0 0.0
    %280 = vmatpush1.msra.mxu0 0.0
    %281 = vmatprep.subr.mxu0 0.0
    %282 = vmatpush1.msra.mxu0 0.0
    %283 = vmatprep.subr.mxu0 0.0
    %284 = vmatpush1.msra.mxu0 0.0
    %285 = vmatprep.subr.mxu0 0.0
    %286 = vmatpush1.msra.mxu0 0.0
    %287 = vmatprep.subr.mxu0 0.0
    %288 = vmatpush1.msra.mxu0 0.0
    %289 = vmatprep.subr.mxu0 0.0
    %290 = vmatpush1.msra.mxu0 0.0
    %291 = vmatprep.subr.mxu0 0.0
    %292 = vmatpush1.msra.mxu0 0.0
    %293 = vmatprep.mubr.f32.mxu0 0.0
    %v294 = vand.u32 %v44, 4294901760
    %v295 = vsub.f32 %v44, %v294
    %v296 = vand.u32 %v295, 4294901760
    %v297 = vsub.f32 %v295, %v296
    %v298 = vand.u32 %v297, 4294901760
    %299 = vmatmul.mubr.f32.gmra.mrb[0].mxu0 %v298
    %v300 = vpop.f32.mrb[0].mxu0
    %v301 = vadd.f32 %v120, %v300
    %v302 = vpop.f32.mrb[0].mxu0
    %v303 = vadd.f32 %v120, %v302
    %304 = vmatprep.mubr.f32.mxu0 0.0
    %v305 = vand.u32 %v45, 4294901760
    %v306 = vsub.f32 %v45, %v305
    %v307 = vand.u32 %v306, 4294901760
    %v308 = vsub.f32 %v306, %v307
    %v309 = vand.u32 %v308, 4294901760
    %310 = vmatmul.mubr.f32.gmra.mrb[0].mxu0 %v309
    %v311 = vpop.f32.mrb[0].mxu0
    %v312 = vadd.f32 %v125, %v311
    %v313 = vpop.f32.mrb[0].mxu0
    %v314 = vadd.f32 %v125, %v313
    %315 = vmatprep.mubr.f32.mxu0 0.0
    %v316 = vand.u32 %v46, 4294901760
    %v317 = vsub.f32 %v46, %v316
    %v318 = vand.u32 %v317, 4294901760
    %v319 = vsub.f32 %v317, %v318
    %v320 = vand.u32 %v319, 4294901760
    %321 = vmatmul.mubr.f32.gmra.mrb[0].mxu0 %v320
    %v322 = vpop.f32.mrb[0].mxu0
    %v323 = vadd.f32 %v130, %v322
    %v324 = vpop.f32.mrb[0].mxu0
    %v325 = vadd.f32 %v130, %v324
    %326 = vmatprep.mubr.f32.mxu0 0.0
    %v327 = vand.u32 %v47, 4294901760
    %v328 = vsub.f32 %v47, %v327
    %v329 = vand.u32 %v328, 4294901760
    %v330 = vsub.f32 %v328, %v329
    %v331 = vand.u32 %v330, 4294901760
    %332 = vmatmul.mubr.f32.gmra.mrb[0].mxu0 %v331
    %v333 = vpop.f32.mrb[0].mxu0
    %v334 = vadd.f32 %v135, %v333
    %v335 = vpop.f32.mrb[0].mxu0
    %v336 = vadd.f32 %v135, %v335
    %337 = vmatprep.mubr.f32.mxu0 0.0
    %v338 = vand.u32 %v48, 4294901760
    %v339 = vsub.f32 %v48, %v338
    %v340 = vand.u32 %v339, 4294901760
    %v341 = vsub.f32 %v339, %v340
    %v342 = vand.u32 %v341, 4294901760
    %343 = vmatmul.mubr.f32.gmra.mrb[0].mxu0 %v342
    %v344 = vpop.f32.mrb[0].mxu0
    %v345 = vadd.f32 %v140, %v344
    %v346 = vpop.f32.mrb[0].mxu0
    %v347 = vadd.f32 %v140, %v346
    %348 = vmatprep.mubr.f32.mxu0 0.0
    %v349 = vand.u32 %v49, 4294901760
    %v350 = vsub.f32 %v49, %v349
    %v351 = vand.u32 %v350, 4294901760
    %v352 = vsub.f32 %v350, %v351
    %v353 = vand.u32 %v352, 4294901760
    %354 = vmatmul.mubr.f32.gmra.mrb[0].mxu0 %v353
    %v355 = vpop.f32.mrb[0].mxu0
    %v356 = vadd.f32 %v145, %v355
    %v357 = vpop.f32.mrb[0].mxu0
    %v358 = vadd.f32 %v145, %v357
    %359 = vmatprep.mubr.f32.mxu0 0.0
    %v360 = vand.u32 %v50, 4294901760
    %v361 = vsub.f32 %v50, %v360
    %v362 = vand.u32 %v361, 4294901760
    %v363 = vsub.f32 %v361, %v362
    %v364 = vand.u32 %v363, 4294901760
    %365 = vmatmul.mubr.f32.gmra.mrb[0].mxu0 %v364
    %v366 = vpop.f32.mrb[0].mxu0
    %v367 = vadd.f32 %v150, %v366
    %v368 = vpop.f32.mrb[0].mxu0
    %v369 = vadd.f32 %v150, %v368
    %370 = vmatprep.mubr.f32.mxu0 0.0
    %v371 = vand.u32 %v51, 4294901760
    %v372 = vsub.f32 %v51, %v371
    %v373 = vand.u32 %v372, 4294901760
    %v374 = vsub.f32 %v372, %v373
    %v375 = vand.u32 %v374, 4294901760
    %376 = vmatmul.mubr.f32.gmra.mrb[0].mxu0 %v375
    %v377 = vpop.f32.mrb[0].mxu0
    %v378 = vadd.f32 %v155, %v377
    %v379 = vpop.f32.mrb[0].mxu0
    %v380 = vadd.f32 %v155, %v379
    %381 = vmatprep.mubr.f32.mxu0 0.0
    %v382 = vand.u32 %v52, 4294901760
    %v383 = vsub.f32 %v52, %v382
    %v384 = vand.u32 %v383, 4294901760
    %v385 = vsub.f32 %v383, %v384
    %v386 = vand.u32 %v385, 4294901760
    %387 = vmatmul.mubr.f32.gmra.mrb[0].mxu0 %v386
    %v388 = vpop.f32.mrb[0].mxu0
    %v389 = vadd.f32 %v160, %v388
    %v390 = vpop.f32.mrb[0].mxu0
    %v391 = vadd.f32 %v160, %v390
    %392 = vmatprep.mubr.f32.mxu0 0.0
    %v393 = vand.u32 %v53, 4294901760
    %v394 = vsub.f32 %v53, %v393
    %v395 = vand.u32 %v394, 4294901760
    %v396 = vsub.f32 %v394, %v395
    %v397 = vand.u32 %v396, 4294901760
    %398 = vmatmul.mubr.f32.gmra.mrb[0].mxu0 %v397
    %v399 = vpop.f32.mrb[0].mxu0
    %v400 = vadd.f32 %v165, %v399
    %v401 = vpop.f32.mrb[0].mxu0
    %v402 = vadd.f32 %v165, %v401
    %403 = vmatprep.mubr.f32.mxu0 0.0
    %v404 = vand.u32 %v54, 4294901760
    %v405 = vsub.f32 %v54, %v404
    %v406 = vand.u32 %v405, 4294901760
    %v407 = vsub.f32 %v405, %v406
    %v408 = vand.u32 %v407, 4294901760
    %409 = vmatmul.mubr.f32.gmra.mrb[0].mxu0 %v408
    %v410 = vpop.f32.mrb[0].mxu0
    %v411 = vadd.f32 %v170, %v410
    %v412 = vpop.f32.mrb[0].mxu0
    %v413 = vadd.f32 %v170, %v412
    %414 = vmatprep.mubr.f32.mxu0 0.0
    %v415 = vand.u32 %v55, 4294901760
    %v416 = vsub.f32 %v55, %v415
    %v417 = vand.u32 %v416, 4294901760
    %v418 = vsub.f32 %v416, %v417
    %v419 = vand.u32 %v418, 4294901760
    %420 = vmatmul.mubr.f32.gmra.mrb[0].mxu0 %v419
    %v421 = vpop.f32.mrb[0].mxu0
    %v422 = vadd.f32 %v175, %v421
    %v423 = vpop.f32.mrb[0].mxu0
    %v424 = vadd.f32 %v175, %v423
    %425 = vmatprep.mubr.f32.mxu0 0.0
    %v426 = vand.u32 %v56, 4294901760
    %v427 = vsub.f32 %v56, %v426
    %v428 = vand.u32 %v427, 4294901760
    %v429 = vsub.f32 %v427, %v428
    %v430 = vand.u32 %v429, 4294901760
    %431 = vmatmul.mubr.f32.gmra.mrb[0].mxu0 %v430
    %v432 = vpop.f32.mrb[0].mxu0
    %v433 = vadd.f32 %v180, %v432
    %v434 = vpop.f32.mrb[0].mxu0
    %v435 = vadd.f32 %v180, %v434
    %436 = vmatprep.mubr.f32.mxu0 0.0
    %v437 = vand.u32 %v57, 4294901760
    %v438 = vsub.f32 %v57, %v437
    %v439 = vand.u32 %v438, 4294901760
    %v440 = vsub.f32 %v438, %v439
    %v441 = vand.u32 %v440, 4294901760
    %442 = vmatmul.mubr.f32.gmra.mrb[0].mxu0 %v441
    %v443 = vpop.f32.mrb[0].mxu0
    %v444 = vadd.f32 %v185, %v443
    %v445 = vpop.f32.mrb[0].mxu0
    %v446 = vadd.f32 %v185, %v445
    %447 = vmatprep.mubr.f32.mxu0 0.0
    %v448 = vand.u32 %v58, 4294901760
    %v449 = vsub.f32 %v58, %v448
    %v450 = vand.u32 %v449, 4294901760
    %v451 = vsub.f32 %v449, %v450
    %v452 = vand.u32 %v451, 4294901760
    %453 = vmatmul.mubr.f32.gmra.mrb[0].mxu0 %v452
    %v454 = vpop.f32.mrb[0].mxu0
    %v455 = vadd.f32 %v190, %v454
    %v456 = vpop.f32.mrb[0].mxu0
    %v457 = vadd.f32 %v190, %v456
    %458 = vmatprep.mubr.f32.mxu0 0.0
    %v459 = vand.u32 %v59, 4294901760
    %v460 = vsub.f32 %v59, %v459
    %v461 = vand.u32 %v460, 4294901760
    %v462 = vsub.f32 %v460, %v461
    %v463 = vand.u32 %v462, 4294901760
    %464 = vmatmul.mubr.f32.gmra.mrb[0].mxu0 %v463
    %v465 = vpop.f32.mrb[0].mxu0
    %v466 = vadd.f32 %v195, %v465
    %v467 = vpop.f32.mrb[0].mxu0
    %v468 = vadd.f32 %v195, %v467
    %469 = vdwg.mxu0
    %v470 = vand.u32 %v86, 4294901760
    %v471 = vsub.f32 %v86, %v470
    %v472 = vand.u32 %v471, 4294901760
    %v473 = vsub.f32 %v471, %v472
    %v474 = vand.u32 %v473, 4294901760
    %475 = vmatprep.subr.mxu0 %v474
    %v476 = vand.u32 %v85, 4294901760
    %v477 = vsub.f32 %v85, %v476
    %v478 = vand.u32 %v477, 4294901760
    %v479 = vsub.f32 %v477, %v478
    %v480 = vand.u32 %v479, 4294901760
    %481 = vmatpush1.msra.mxu0 %v480
    %v482 = vand.u32 %v88, 4294901760
    %v483 = vsub.f32 %v88, %v482
    %v484 = vand.u32 %v483, 4294901760
    %v485 = vsub.f32 %v483, %v484
    %v486 = vand.u32 %v485, 4294901760
    %487 = vmatprep.subr.mxu0 %v486
    %v488 = vand.u32 %v87, 4294901760
    %v489 = vsub.f32 %v87, %v488
    %v490 = vand.u32 %v489, 4294901760
    %v491 = vsub.f32 %v489, %v490
    %v492 = vand.u32 %v491, 4294901760
    %493 = vmatpush1.msra.mxu0 %v492
    %v494 = vand.u32 %v90, 4294901760
    %v495 = vsub.f32 %v90, %v494
    %v496 = vand.u32 %v495, 4294901760
    %v497 = vsub.f32 %v495, %v496
    %v498 = vand.u32 %v497, 4294901760
    %499 = vmatprep.subr.mxu0 %v498
    %v500 = vand.u32 %v89, 4294901760
    %v501 = vsub.f32 %v89, %v500
    %v502 = vand.u32 %v501, 4294901760
    %v503 = vsub.f32 %v501, %v502
    %v504 = vand.u32 %v503, 4294901760
    %505 = vmatpush1.msra.mxu0 %v504
    %v506 = vand.u32 %v92, 4294901760
    %v507 = vsub.f32 %v92, %v506
    %v508 = vand.u32 %v507, 4294901760
    %v509 = vsub.f32 %v507, %v508
    %v510 = vand.u32 %v509, 4294901760
    %511 = vmatprep.subr.mxu0 %v510
    %v512 = vand.u32 %v91, 4294901760
    %v513 = vsub.f32 %v91, %v512
    %v514 = vand.u32 %v513, 4294901760
    %v515 = vsub.f32 %v513, %v514
    %v516 = vand.u32 %v515, 4294901760
    %517 = vmatpush1.msra.mxu0 %v516
    %v518 = vand.u32 %v94, 4294901760
    %v519 = vsub.f32 %v94, %v518
    %v520 = vand.u32 %v519, 4294901760
    %v521 = vsub.f32 %v519, %v520
    %v522 = vand.u32 %v521, 4294901760
    %523 = vmatprep.subr.mxu0 %v522
    %v524 = vand.u32 %v93, 4294901760
    %v525 = vsub.f32 %v93, %v524
    %v526 = vand.u32 %v525, 4294901760
    %v527 = vsub.f32 %v525, %v526
    %v528 = vand.u32 %v527, 4294901760
    %529 = vmatpush1.msra.mxu0 %v528
    %v530 = vand.u32 %v96, 4294901760
    %v531 = vsub.f32 %v96, %v530
    %v532 = vand.u32 %v531, 4294901760
    %v533 = vsub.f32 %v531, %v532
    %v534 = vand.u32 %v533, 4294901760
    %535 = vmatprep.subr.mxu0 %v534
    %v536 = vand.u32 %v95, 4294901760
    %v537 = vsub.f32 %v95, %v536
    %v538 = vand.u32 %v537, 4294901760
    %v539 = vsub.f32 %v537, %v538
    %v540 = vand.u32 %v539, 4294901760
    %541 = vmatpush1.msra.mxu0 %v540
    %v542 = vand.u32 %v98, 4294901760
    %v543 = vsub.f32 %v98, %v542
    %v544 = vand.u32 %v543, 4294901760
    %v545 = vsub.f32 %v543, %v544
    %v546 = vand.u32 %v545, 4294901760
    %547 = vmatprep.subr.mxu0 %v546
    %v548 = vand.u32 %v97, 4294901760
    %v549 = vsub.f32 %v97, %v548
    %v550 = vand.u32 %v549, 4294901760
    %v551 = vsub.f32 %v549, %v550
    %v552 = vand.u32 %v551, 4294901760
    %553 = vmatpush1.msra.mxu0 %v552
    %v554 = vand.u32 %v100, 4294901760
    %v555 = vsub.f32 %v100, %v554
    %v556 = vand.u32 %v555, 4294901760
    %v557 = vsub.f32 %v555, %v556
    %v558 = vand.u32 %v557, 4294901760
    %559 = vmatprep.subr.mxu0 %v558
    %v560 = vand.u32 %v99, 4294901760
    %v561 = vsub.f32 %v99, %v560
    %v562 = vand.u32 %v561, 4294901760
    %v563 = vsub.f32 %v561, %v562
    %v564 = vand.u32 %v563, 4294901760
    %565 = vmatpush1.msra.mxu0 %v564
    %v566 = vand.u32 %v102, 4294901760
    %v567 = vsub.f32 %v102, %v566
    %v568 = vand.u32 %v567, 4294901760
    %v569 = vsub.f32 %v567, %v568
    %v570 = vand.u32 %v569, 4294901760
    %571 = vmatprep.subr.mxu0 %v570
    %v572 = vand.u32 %v101, 4294901760
    %v573 = vsub.f32 %v101, %v572
    %v574 = vand.u32 %v573, 4294901760
    %v575 = vsub.f32 %v573, %v574
    %v576 = vand.u32 %v575, 4294901760
    %577 = vmatpush1.msra.mxu0 %v576
    %v578 = vand.u32 %v104, 4294901760
    %v579 = vsub.f32 %v104, %v578
    %v580 = vand.u32 %v579, 4294901760
    %v581 = vsub.f32 %v579, %v580
    %v582 = vand.u32 %v581, 4294901760
    %583 = vmatprep.subr.mxu0 %v582
    %v584 = vand.u32 %v103, 4294901760
    %v585 = vsub.f32 %v103, %v584
    %v586 = vand.u32 %v585, 4294901760
    %v587 = vsub.f32 %v585, %v586
    %v588 = vand.u32 %v587, 4294901760
    %589 = vmatpush1.msra.mxu0 %v588
    %v590 = vand.u32 %v106, 4294901760
    %v591 = vsub.f32 %v106, %v590
    %v592 = vand.u32 %v591, 4294901760
    %v593 = vsub.f32 %v591, %v592
    %v594 = vand.u32 %v593, 4294901760
    %595 = vmatprep.subr.mxu0 %v594
    %v596 = vand.u32 %v105, 4294901760
    %v597 = vsub.f32 %v105, %v596
    %v598 = vand.u32 %v597, 4294901760
    %v599 = vsub.f32 %v597, %v598
    %v600 = vand.u32 %v599, 4294901760
    %601 = vmatpush1.msra.mxu0 %v600
    %v602 = vand.u32 %v108, 4294901760
    %v603 = vsub.f32 %v108, %v602
    %v604 = vand.u32 %v603, 4294901760
    %v605 = vsub.f32 %v603, %v604
    %v606 = vand.u32 %v605, 4294901760
    %607 = vmatprep.subr.mxu0 %v606
    %v608 = vand.u32 %v107, 4294901760
    %v609 = vsub.f32 %v107, %v608
    %v610 = vand.u32 %v609, 4294901760
    %v611 = vsub.f32 %v609, %v610
    %v612 = vand.u32 %v611, 4294901760
    %613 = vmatpush1.msra.mxu0 %v612
    %v614 = vand.u32 %v110, 4294901760
    %v615 = vsub.f32 %v110, %v614
    %v616 = vand.u32 %v615, 4294901760
    %v617 = vsub.f32 %v615, %v616
    %v618 = vand.u32 %v617, 4294901760
    %619 = vmatprep.subr.mxu0 %v618
    %v620 = vand.u32 %v109, 4294901760
    %v621 = vsub.f32 %v109, %v620
    %v622 = vand.u32 %v621, 4294901760
    %v623 = vsub.f32 %v621, %v622
    %v624 = vand.u32 %v623, 4294901760
    %625 = vmatpush1.msra.mxu0 %v624
    %v626 = vand.u32 %v112, 4294901760
    %v627 = vsub.f32 %v112, %v626
    %v628 = vand.u32 %v627, 4294901760
    %v629 = vsub.f32 %v627, %v628
    %v630 = vand.u32 %v629, 4294901760
    %631 = vmatprep.subr.mxu0 %v630
    %v632 = vand.u32 %v111, 4294901760
    %v633 = vsub.f32 %v111, %v632
    %v634 = vand.u32 %v633, 4294901760
    %v635 = vsub.f32 %v633, %v634
    %v636 = vand.u32 %v635, 4294901760
    %637 = vmatpush1.msra.mxu0 %v636
    %v638 = vand.u32 %v114, 4294901760
    %v639 = vsub.f32 %v114, %v638
    %v640 = vand.u32 %v639, 4294901760
    %v641 = vsub.f32 %v639, %v640
    %v642 = vand.u32 %v641, 4294901760
    %643 = vmatprep.subr.mxu0 %v642
    %v644 = vand.u32 %v113, 4294901760
    %v645 = vsub.f32 %v113, %v644
    %v646 = vand.u32 %v645, 4294901760
    %v647 = vsub.f32 %v645, %v646
    %v648 = vand.u32 %v647, 4294901760
    %649 = vmatpush1.msra.mxu0 %v648
    %v650 = vand.u32 %v116, 4294901760
    %v651 = vsub.f32 %v116, %v650
    %v652 = vand.u32 %v651, 4294901760
    %v653 = vsub.f32 %v651, %v652
    %v654 = vand.u32 %v653, 4294901760
    %655 = vmatprep.subr.mxu0 %v654
    %v656 = vand.u32 %v115, 4294901760
    %v657 = vsub.f32 %v115, %v656
    %v658 = vand.u32 %v657, 4294901760
    %v659 = vsub.f32 %v657, %v658
    %v660 = vand.u32 %v659, 4294901760
    %661 = vmatpush1.msra.mxu0 %v660
    %662 = vmatprep.subr.mxu0 0.0
    %663 = vmatpush1.msra.mxu0 0.0
    %664 = vmatprep.subr.mxu0 0.0
    %665 = vmatpush1.msra.mxu0 0.0
    %666 = vmatprep.subr.mxu0 0.0
    %667 = vmatpush1.msra.mxu0 0.0
    %668 = vmatprep.subr.mxu0 0.0
    %669 = vmatpush1.msra.mxu0 0.0
    %670 = vmatprep.subr.mxu0 0.0
    %671 = vmatpush1.msra.mxu0 0.0
    %672 = vmatprep.subr.mxu0 0.0
    %673 = vmatpush1.msra.mxu0 0.0
    %674 = vmatprep.subr.mxu0 0.0
    %675 = vmatpush1.msra.mxu0 0.0
    %676 = vmatprep.subr.mxu0 0.0
    %677 = vmatpush1.msra.mxu0 0.0
    %678 = vmatprep.subr.mxu0 0.0
    %679 = vmatpush1.msra.mxu0 0.0
    %680 = vmatprep.subr.mxu0 0.0
    %681 = vmatpush1.msra.mxu0 0.0
    %682 = vmatprep.subr.mxu0 0.0
    %683 = vmatpush1.msra.mxu0 0.0
    %684 = vmatprep.subr.mxu0 0.0
    %685 = vmatpush1.msra.mxu0 0.0
    %686 = vmatprep.subr.mxu0 0.0
    %687 = vmatpush1.msra.mxu0 0.0
    %688 = vmatprep.subr.mxu0 0.0
    %689 = vmatpush1.msra.mxu0 0.0
    %690 = vmatprep.subr.mxu0 0.0
    %691 = vmatpush1.msra.mxu0 0.0
    %692 = vmatprep.subr.mxu0 0.0
    %693 = vmatpush1.msra.mxu0 0.0
    %694 = vmatprep.mubr.f32.mxu0 0.0
    %v695 = vand.u32 %v44, 4294901760
    %696 = vmatmul.mubr.f32.gmra.mrb[0].mxu0 %v695
    %v697 = vpop.f32.mrb[0].mxu0
    %v698 = vadd.f32 %v301, %v697
    %v699 = vpop.f32.mrb[0].mxu0
    %v700 = vadd.f32 %v303, %v699
    %701 = vmatprep.mubr.f32.mxu0 0.0
    %v702 = vand.u32 %v45, 4294901760
    %703 = vmatmul.mubr.f32.gmra.mrb[0].mxu0 %v702
    %v704 = vpop.f32.mrb[0].mxu0
    %v705 = vadd.f32 %v312, %v704
    %v706 = vpop.f32.mrb[0].mxu0
    %v707 = vadd.f32 %v314, %v706
    %708 = vmatprep.mubr.f32.mxu0 0.0
    %v709 = vand.u32 %v46, 4294901760
    %710 = vmatmul.mubr.f32.gmra.mrb[0].mxu0 %v709
    %v711 = vpop.f32.mrb[0].mxu0
    %v712 = vadd.f32 %v323, %v711
    %v713 = vpop.f32.mrb[0].mxu0
    %v714 = vadd.f32 %v325, %v713
    %715 = vmatprep.mubr.f32.mxu0 0.0
    %v716 = vand.u32 %v47, 4294901760
    %717 = vmatmul.mubr.f32.gmra.mrb[0].mxu0 %v716
    %v718 = vpop.f32.mrb[0].mxu0
    %v719 = vadd.f32 %v334, %v718
    %v720 = vpop.f32.mrb[0].mxu0
    %v721 = vadd.f32 %v336, %v720
    %722 = vmatprep.mubr.f32.mxu0 0.0
    %v723 = vand.u32 %v48, 4294901760
    %724 = vmatmul.mubr.f32.gmra.mrb[0].mxu0 %v723
    %v725 = vpop.f32.mrb[0].mxu0
    %v726 = vadd.f32 %v345, %v725
    %v727 = vpop.f32.mrb[0].mxu0
    %v728 = vadd.f32 %v347, %v727
    %729 = vmatprep.mubr.f32.mxu0 0.0
    %v730 = vand.u32 %v49, 4294901760
    %731 = vmatmul.mubr.f32.gmra.mrb[0].mxu0 %v730
    %v732 = vpop.f32.mrb[0].mxu0
    %v733 = vadd.f32 %v356, %v732
    %v734 = vpop.f32.mrb[0].mxu0
    %v735 = vadd.f32 %v358, %v734
    %736 = vmatprep.mubr.f32.mxu0 0.0
    %v737 = vand.u32 %v50, 4294901760
    %738 = vmatmul.mubr.f32.gmra.mrb[0].mxu0 %v737
    %v739 = vpop.f32.mrb[0].mxu0
    %v740 = vadd.f32 %v367, %v739
    %v741 = vpop.f32.mrb[0].mxu0
    %v742 = vadd.f32 %v369, %v741
    %743 = vmatprep.mubr.f32.mxu0 0.0
    %v744 = vand.u32 %v51, 4294901760
    %745 = vmatmul.mubr.f32.gmra.mrb[0].mxu0 %v744
    %v746 = vpop.f32.mrb[0].mxu0
    %v747 = vadd.f32 %v378, %v746
    %v748 = vpop.f32.mrb[0].mxu0
    %v749 = vadd.f32 %v380, %v748
    %750 = vmatprep.mubr.f32.mxu0 0.0
    %v751 = vand.u32 %v52, 4294901760
    %752 = vmatmul.mubr.f32.gmra.mrb[0].mxu0 %v751
    %v753 = vpop.f32.mrb[0].mxu0
    %v754 = vadd.f32 %v389, %v753
    %v755 = vpop.f32.mrb[0].mxu0
    %v756 = vadd.f32 %v391, %v755
    %757 = vmatprep.mubr.f32.mxu0 0.0
    %v758 = vand.u32 %v53, 4294901760
    %759 = vmatmul.mubr.f32.gmra.mrb[0].mxu0 %v758
    %v760 = vpop.f32.mrb[0].mxu0
    %v761 = vadd.f32 %v400, %v760
    %v762 = vpop.f32.mrb[0].mxu0
    %v763 = vadd.f32 %v402, %v762
    %764 = vmatprep.mubr.f32.mxu0 0.0
    %v765 = vand.u32 %v54, 4294901760
    %766 = vmatmul.mubr.f32.gmra.mrb[0].mxu0 %v765
    %v767 = vpop.f32.mrb[0].mxu0
    %v768 = vadd.f32 %v411, %v767
    %v769 = vpop.f32.mrb[0].mxu0
    %v770 = vadd.f32 %v413, %v769
    %771 = vmatprep.mubr.f32.mxu0 0.0
    %v772 = vand.u32 %v55, 4294901760
    %773 = vmatmul.mubr.f32.gmra.mrb[0].mxu0 %v772
    %v774 = vpop.f32.mrb[0].mxu0
    %v775 = vadd.f32 %v422, %v774
    %v776 = vpop.f32.mrb[0].mxu0
    %v777 = vadd.f32 %v424, %v776
    %778 = vmatprep.mubr.f32.mxu0 0.0
    %v779 = vand.u32 %v56, 4294901760
    %780 = vmatmul.mubr.f32.gmra.mrb[0].mxu0 %v779
    %v781 = vpop.f32.mrb[0].mxu0
    %v782 = vadd.f32 %v433, %v781
    %v783 = vpop.f32.mrb[0].mxu0
    %v784 = vadd.f32 %v435, %v783
    %785 = vmatprep.mubr.f32.mxu0 0.0
    %v786 = vand.u32 %v57, 4294901760
    %787 = vmatmul.mubr.f32.gmra.mrb[0].mxu0 %v786
    %v788 = vpop.f32.mrb[0].mxu0
    %v789 = vadd.f32 %v444, %v788
    %v790 = vpop.f32.mrb[0].mxu0
    %v791 = vadd.f32 %v446, %v790
    %792 = vmatprep.mubr.f32.mxu0 0.0
    %v793 = vand.u32 %v58, 4294901760
    %794 = vmatmul.mubr.f32.gmra.mrb[0].mxu0 %v793
    %v795 = vpop.f32.mrb[0].mxu0
    %v796 = vadd.f32 %v455, %v795
    %v797 = vpop.f32.mrb[0].mxu0
    %v798 = vadd.f32 %v457, %v797
    %799 = vmatprep.mubr.f32.mxu0 0.0
    %v800 = vand.u32 %v59, 4294901760
    %801 = vmatmul.mubr.f32.gmra.mrb[0].mxu0 %v800
    %v802 = vpop.f32.mrb[0].mxu0
    %v803 = vadd.f32 %v466, %v802
    %v804 = vpop.f32.mrb[0].mxu0
    %v805 = vadd.f32 %v468, %v804
    %806 = vdwg.mxu0
    %v807 = vand.u32 %v86, 4294901760
    %v808 = vsub.f32 %v86, %v807
    %809 = vmatprep.subr.mxu0 %v808
    %v810 = vand.u32 %v85, 4294901760
    %v811 = vsub.f32 %v85, %v810
    %812 = vmatpush1.msra.mxu0 %v811
    %v813 = vand.u32 %v88, 4294901760
    %v814 = vsub.f32 %v88, %v813
    %815 = vmatprep.subr.mxu0 %v814
    %v816 = vand.u32 %v87, 4294901760
    %v817 = vsub.f32 %v87, %v816
    %818 = vmatpush1.msra.mxu0 %v817
    %v819 = vand.u32 %v90, 4294901760
    %v820 = vsub.f32 %v90, %v819
    %821 = vmatprep.subr.mxu0 %v820
    %v822 = vand.u32 %v89, 4294901760
    %v823 = vsub.f32 %v89, %v822
    %824 = vmatpush1.msra.mxu0 %v823
    %v825 = vand.u32 %v92, 4294901760
    %v826 = vsub.f32 %v92, %v825
    %827 = vmatprep.subr.mxu0 %v826
    %v828 = vand.u32 %v91, 4294901760
    %v829 = vsub.f32 %v91, %v828
    %830 = vmatpush1.msra.mxu0 %v829
    %v831 = vand.u32 %v94, 4294901760
    %v832 = vsub.f32 %v94, %v831
    %833 = vmatprep.subr.mxu0 %v832
    %v834 = vand.u32 %v93, 4294901760
    %v835 = vsub.f32 %v93, %v834
    %836 = vmatpush1.msra.mxu0 %v835
    %v837 = vand.u32 %v96, 4294901760
    %v838 = vsub.f32 %v96, %v837
    %839 = vmatprep.subr.mxu0 %v838
    %v840 = vand.u32 %v95, 4294901760
    %v841 = vsub.f32 %v95, %v840
    %842 = vmatpush1.msra.mxu0 %v841
    %v843 = vand.u32 %v98, 4294901760
    %v844 = vsub.f32 %v98, %v843
    %845 = vmatprep.subr.mxu0 %v844
    %v846 = vand.u32 %v97, 4294901760
    %v847 = vsub.f32 %v97, %v846
    %848 = vmatpush1.msra.mxu0 %v847
    %v849 = vand.u32 %v100, 4294901760
    %v850 = vsub.f32 %v100, %v849
    %851 = vmatprep.subr.mxu0 %v850
    %v852 = vand.u32 %v99, 4294901760
    %v853 = vsub.f32 %v99, %v852
    %854 = vmatpush1.msra.mxu0 %v853
    %v855 = vand.u32 %v102, 4294901760
    %v856 = vsub.f32 %v102, %v855
    %857 = vmatprep.subr.mxu0 %v856
    %v858 = vand.u32 %v101, 4294901760
    %v859 = vsub.f32 %v101, %v858
    %860 = vmatpush1.msra.mxu0 %v859
    %v861 = vand.u32 %v104, 4294901760
    %v862 = vsub.f32 %v104, %v861
    %863 = vmatprep.subr.mxu0 %v862
    %v864 = vand.u32 %v103, 4294901760
    %v865 = vsub.f32 %v103, %v864
    %866 = vmatpush1.msra.mxu0 %v865
    %v867 = vand.u32 %v106, 4294901760
    %v868 = vsub.f32 %v106, %v867
    %869 = vmatprep.subr.mxu0 %v868
    %v870 = vand.u32 %v105, 4294901760
    %v871 = vsub.f32 %v105, %v870
    %872 = vmatpush1.msra.mxu0 %v871
    %v873 = vand.u32 %v108, 4294901760
    %v874 = vsub.f32 %v108, %v873
    %875 = vmatprep.subr.mxu0 %v874
    %v876 = vand.u32 %v107, 4294901760
    %v877 = vsub.f32 %v107, %v876
    %878 = vmatpush1.msra.mxu0 %v877
    %v879 = vand.u32 %v110, 4294901760
    %v880 = vsub.f32 %v110, %v879
    %881 = vmatprep.subr.mxu0 %v880
    %v882 = vand.u32 %v109, 4294901760
    %v883 = vsub.f32 %v109, %v882
    %884 = vmatpush1.msra.mxu0 %v883
    %v885 = vand.u32 %v112, 4294901760
    %v886 = vsub.f32 %v112, %v885
    %887 = vmatprep.subr.mxu0 %v886
    %v888 = vand.u32 %v111, 4294901760
    %v889 = vsub.f32 %v111, %v888
    %890 = vmatpush1.msra.mxu0 %v889
    %v891 = vand.u32 %v114, 4294901760
    %v892 = vsub.f32 %v114, %v891
    %893 = vmatprep.subr.mxu0 %v892
    %v894 = vand.u32 %v113, 4294901760
    %v895 = vsub.f32 %v113, %v894
    %896 = vmatpush1.msra.mxu0 %v895
    %v897 = vand.u32 %v116, 4294901760
    %v898 = vsub.f32 %v116, %v897
    %899 = vmatprep.subr.mxu0 %v898
    %v900 = vand.u32 %v115, 4294901760
    %v901 = vsub.f32 %v115, %v900
    %902 = vmatpush1.msra.mxu0 %v901
    %903 = vmatprep.subr.mxu0 0.0
    %904 = vmatpush1.msra.mxu0 0.0
    %905 = vmatprep.subr.mxu0 0.0
    %906 = vmatpush1.msra.mxu0 0.0
    %907 = vmatprep.subr.mxu0 0.0
    %908 = vmatpush1.msra.mxu0 0.0
    %909 = vmatprep.subr.mxu0 0.0
    %910 = vmatpush1.msra.mxu0 0.0
    %911 = vmatprep.subr.mxu0 0.0
    %912 = vmatpush1.msra.mxu0 0.0
    %913 = vmatprep.subr.mxu0 0.0
    %914 = vmatpush1.msra.mxu0 0.0
    %915 = vmatprep.subr.mxu0 0.0
    %916 = vmatpush1.msra.mxu0 0.0
    %917 = vmatprep.subr.mxu0 0.0
    %918 = vmatpush1.msra.mxu0 0.0
    %919 = vmatprep.subr.mxu0 0.0
    %920 = vmatpush1.msra.mxu0 0.0
    %921 = vmatprep.subr.mxu0 0.0
    %922 = vmatpush1.msra.mxu0 0.0
    %923 = vmatprep.subr.mxu0 0.0
    %924 = vmatpush1.msra.mxu0 0.0
    %925 = vmatprep.subr.mxu0 0.0
    %926 = vmatpush1.msra.mxu0 0.0
    %927 = vmatprep.subr.mxu0 0.0
    %928 = vmatpush1.msra.mxu0 0.0
    %929 = vmatprep.subr.mxu0 0.0
    %930 = vmatpush1.msra.mxu0 0.0
    %931 = vmatprep.subr.mxu0 0.0
    %932 = vmatpush1.msra.mxu0 0.0
    %933 = vmatprep.subr.mxu0 0.0
    %934 = vmatpush1.msra.mxu0 0.0
    %935 = vmatprep.mubr.f32.mxu0 0.0
    %v936 = vand.u32 %v44, 4294901760
    %v937 = vsub.f32 %v44, %v936
    %938 = vmatmul.mubr.f32.gmra.mrb[0].mxu0 %v937
    %v939 = vpop.f32.mrb[0].mxu0
    %v940 = vadd.f32 %v698, %v939
    %v941 = vpop.f32.mrb[0].mxu0
    %v942 = vadd.f32 %v700, %v941
    %943 = vmatprep.mubr.f32.mxu0 0.0
    %v944 = vand.u32 %v45, 4294901760
    %v945 = vsub.f32 %v45, %v944
    %946 = vmatmul.mubr.f32.gmra.mrb[0].mxu0 %v945
    %v947 = vpop.f32.mrb[0].mxu0
    %v948 = vadd.f32 %v705, %v947
    %v949 = vpop.f32.mrb[0].mxu0
    %v950 = vadd.f32 %v707, %v949
    %951 = vmatprep.mubr.f32.mxu0 0.0
    %v952 = vand.u32 %v46, 4294901760
    %v953 = vsub.f32 %v46, %v952
    %954 = vmatmul.mubr.f32.gmra.mrb[0].mxu0 %v953
    %v955 = vpop.f32.mrb[0].mxu0
    %v956 = vadd.f32 %v712, %v955
    %v957 = vpop.f32.mrb[0].mxu0
    %v958 = vadd.f32 %v714, %v957
    %959 = vmatprep.mubr.f32.mxu0 0.0
    %v960 = vand.u32 %v47, 4294901760
    %v961 = vsub.f32 %v47, %v960
    %962 = vmatmul.mubr.f32.gmra.mrb[0].mxu0 %v961
    %v963 = vpop.f32.mrb[0].mxu0
    %v964 = vadd.f32 %v719, %v963
    %v965 = vpop.f32.mrb[0].mxu0
    %v966 = vadd.f32 %v721, %v965
    %967 = vmatprep.mubr.f32.mxu0 0.0
    %v968 = vand.u32 %v48, 4294901760
    %v969 = vsub.f32 %v48, %v968
    %970 = vmatmul.mubr.f32.gmra.mrb[0].mxu0 %v969
    %v971 = vpop.f32.mrb[0].mxu0
    %v972 = vadd.f32 %v726, %v971
    %v973 = vpop.f32.mrb[0].mxu0
    %v974 = vadd.f32 %v728, %v973
    %975 = vmatprep.mubr.f32.mxu0 0.0
    %v976 = vand.u32 %v49, 4294901760
    %v977 = vsub.f32 %v49, %v976
    %978 = vmatmul.mubr.f32.gmra.mrb[0].mxu0 %v977
    %v979 = vpop.f32.mrb[0].mxu0
    %v980 = vadd.f32 %v733, %v979
    %v981 = vpop.f32.mrb[0].mxu0
    %v982 = vadd.f32 %v735, %v981
    %983 = vmatprep.mubr.f32.mxu0 0.0
    %v984 = vand.u32 %v50, 4294901760
    %v985 = vsub.f32 %v50, %v984
    %986 = vmatmul.mubr.f32.gmra.mrb[0].mxu0 %v985
    %v987 = vpop.f32.mrb[0].mxu0
    %v988 = vadd.f32 %v740, %v987
    %v989 = vpop.f32.mrb[0].mxu0
    %v990 = vadd.f32 %v742, %v989
    %991 = vmatprep.mubr.f32.mxu0 0.0
    %v992 = vand.u32 %v51, 4294901760
    %v993 = vsub.f32 %v51, %v992
    %994 = vmatmul.mubr.f32.gmra.mrb[0].mxu0 %v993
    %v995 = vpop.f32.mrb[0].mxu0
    %v996 = vadd.f32 %v747, %v995
    %v997 = vpop.f32.mrb[0].mxu0
    %v998 = vadd.f32 %v749, %v997
    %999 = vmatprep.mubr.f32.mxu0 0.0
    %v1000 = vand.u32 %v52, 4294901760
    %v1001 = vsub.f32 %v52, %v1000
    %1002 = vmatmul.mubr.f32.gmra.mrb[0].mxu0 %v1001
    %v1003 = vpop.f32.mrb[0].mxu0
    %v1004 = vadd.f32 %v754, %v1003
    %v1005 = vpop.f32.mrb[0].mxu0
    %v1006 = vadd.f32 %v756, %v1005
    %1007 = vmatprep.mubr.f32.mxu0 0.0
    %v1008 = vand.u32 %v53, 4294901760
    %v1009 = vsub.f32 %v53, %v1008
    %1010 = vmatmul.mubr.f32.gmra.mrb[0].mxu0 %v1009
    %v1011 = vpop.f32.mrb[0].mxu0
    %v1012 = vadd.f32 %v761, %v1011
    %v1013 = vpop.f32.mrb[0].mxu0
    %v1014 = vadd.f32 %v763, %v1013
    %1015 = vmatprep.mubr.f32.mxu0 0.0
    %v1016 = vand.u32 %v54, 4294901760
    %v1017 = vsub.f32 %v54, %v1016
    %1018 = vmatmul.mubr.f32.gmra.mrb[0].mxu0 %v1017
    %v1019 = vpop.f32.mrb[0].mxu0
    %v1020 = vadd.f32 %v768, %v1019
    %v1021 = vpop.f32.mrb[0].mxu0
    %v1022 = vadd.f32 %v770, %v1021
    %1023 = vmatprep.mubr.f32.mxu0 0.0
    %v1024 = vand.u32 %v55, 4294901760
    %v1025 = vsub.f32 %v55, %v1024
    %1026 = vmatmul.mubr.f32.gmra.mrb[0].mxu0 %v1025
    %v1027 = vpop.f32.mrb[0].mxu0
    %v1028 = vadd.f32 %v775, %v1027
    %v1029 = vpop.f32.mrb[0].mxu0
    %v1030 = vadd.f32 %v777, %v1029
    %1031 = vmatprep.mubr.f32.mxu0 0.0
    %v1032 = vand.u32 %v56, 4294901760
    %v1033 = vsub.f32 %v56, %v1032
    %1034 = vmatmul.mubr.f32.gmra.mrb[0].mxu0 %v1033
    %v1035 = vpop.f32.mrb[0].mxu0
    %v1036 = vadd.f32 %v782, %v1035
    %v1037 = vpop.f32.mrb[0].mxu0
    %v1038 = vadd.f32 %v784, %v1037
    %1039 = vmatprep.mubr.f32.mxu0 0.0
    %v1040 = vand.u32 %v57, 4294901760
    %v1041 = vsub.f32 %v57, %v1040
    %1042 = vmatmul.mubr.f32.gmra.mrb[0].mxu0 %v1041
    %v1043 = vpop.f32.mrb[0].mxu0
    %v1044 = vadd.f32 %v789, %v1043
    %v1045 = vpop.f32.mrb[0].mxu0
    %v1046 = vadd.f32 %v791, %v1045
    %1047 = vmatprep.mubr.f32.mxu0 0.0
    %v1048 = vand.u32 %v58, 4294901760
    %v1049 = vsub.f32 %v58, %v1048
    %1050 = vmatmul.mubr.f32.gmra.mrb[0].mxu0 %v1049
    %v1051 = vpop.f32.mrb[0].mxu0
    %v1052 = vadd.f32 %v796, %v1051
    %v1053 = vpop.f32.mrb[0].mxu0
    %v1054 = vadd.f32 %v798, %v1053
    %1055 = vmatprep.mubr.f32.mxu0 0.0
    %v1056 = vand.u32 %v59, 4294901760
    %v1057 = vsub.f32 %v59, %v1056
    %1058 = vmatmul.mubr.f32.gmra.mrb[0].mxu0 %v1057
    %v1059 = vpop.f32.mrb[0].mxu0
    %v1060 = vadd.f32 %v803, %v1059
    %v1061 = vpop.f32.mrb[0].mxu0
    %v1062 = vadd.f32 %v805, %v1061
    %1063 = vdwg.mxu0
    %v1064 = vand.u32 %v86, 4294901760
    %1065 = vmatprep.subr.mxu0 %v1064
    %v1066 = vand.u32 %v85, 4294901760
    %1067 = vmatpush1.msra.mxu0 %v1066
    %v1068 = vand.u32 %v88, 4294901760
    %1069 = vmatprep.subr.mxu0 %v1068
    %v1070 = vand.u32 %v87, 4294901760
    %1071 = vmatpush1.msra.mxu0 %v1070
    %v1072 = vand.u32 %v90, 4294901760
    %1073 = vmatprep.subr.mxu0 %v1072
    %v1074 = vand.u32 %v89, 4294901760
    %1075 = vmatpush1.msra.mxu0 %v1074
    %v1076 = vand.u32 %v92, 4294901760
    %1077 = vmatprep.subr.mxu0 %v1076
    %v1078 = vand.u32 %v91, 4294901760
    %1079 = vmatpush1.msra.mxu0 %v1078
    %v1080 = vand.u32 %v94, 4294901760
    %1081 = vmatprep.subr.mxu0 %v1080
    %v1082 = vand.u32 %v93, 4294901760
    %1083 = vmatpush1.msra.mxu0 %v1082
    %v1084 = vand.u32 %v96, 4294901760
    %1085 = vmatprep.subr.mxu0 %v1084
    %v1086 = vand.u32 %v95, 4294901760
    %1087 = vmatpush1.msra.mxu0 %v1086
    %v1088 = vand.u32 %v98, 4294901760
    %1089 = vmatprep.subr.mxu0 %v1088
    %v1090 = vand.u32 %v97, 4294901760
    %1091 = vmatpush1.msra.mxu0 %v1090
    %v1092 = vand.u32 %v100, 4294901760
    %1093 = vmatprep.subr.mxu0 %v1092
    %v1094 = vand.u32 %v99, 4294901760
    %1095 = vmatpush1.msra.mxu0 %v1094
    %v1096 = vand.u32 %v102, 4294901760
    %1097 = vmatprep.subr.mxu0 %v1096
    %v1098 = vand.u32 %v101, 4294901760
    %1099 = vmatpush1.msra.mxu0 %v1098
    %v1100 = vand.u32 %v104, 4294901760
    %1101 = vmatprep.subr.mxu0 %v1100
    %v1102 = vand.u32 %v103, 4294901760
    %1103 = vmatpush1.msra.mxu0 %v1102
    %v1104 = vand.u32 %v106, 4294901760
    %1105 = vmatprep.subr.mxu0 %v1104
    %v1106 = vand.u32 %v105, 4294901760
    %1107 = vmatpush1.msra.mxu0 %v1106
    %v1108 = vand.u32 %v108, 4294901760
    %1109 = vmatprep.subr.mxu0 %v1108
    %v1110 = vand.u32 %v107, 4294901760
    %1111 = vmatpush1.msra.mxu0 %v1110
    %v1112 = vand.u32 %v110, 4294901760
    %1113 = vmatprep.subr.mxu0 %v1112
    %v1114 = vand.u32 %v109, 4294901760
    %1115 = vmatpush1.msra.mxu0 %v1114
    %v1116 = vand.u32 %v112, 4294901760
    %1117 = vmatprep.subr.mxu0 %v1116
    %v1118 = vand.u32 %v111, 4294901760
    %1119 = vmatpush1.msra.mxu0 %v1118
    %v1120 = vand.u32 %v114, 4294901760
    %1121 = vmatprep.subr.mxu0 %v1120
    %v1122 = vand.u32 %v113, 4294901760
    %1123 = vmatpush1.msra.mxu0 %v1122
    %v1124 = vand.u32 %v116, 4294901760
    %1125 = vmatprep.subr.mxu0 %v1124
    %v1126 = vand.u32 %v115, 4294901760
    %1127 = vmatpush1.msra.mxu0 %v1126
    %1128 = vmatprep.subr.mxu0 0.0
    %1129 = vmatpush1.msra.mxu0 0.0
    %1130 = vmatprep.subr.mxu0 0.0
    %1131 = vmatpush1.msra.mxu0 0.0
    %1132 = vmatprep.subr.mxu0 0.0
    %1133 = vmatpush1.msra.mxu0 0.0
    %1134 = vmatprep.subr.mxu0 0.0
    %1135 = vmatpush1.msra.mxu0 0.0
    %1136 = vmatprep.subr.mxu0 0.0
    %1137 = vmatpush1.msra.mxu0 0.0
    %1138 = vmatprep.subr.mxu0 0.0
    %1139 = vmatpush1.msra.mxu0 0.0
    %1140 = vmatprep.subr.mxu0 0.0
    %1141 = vmatpush1.msra.mxu0 0.0
    %1142 = vmatprep.subr.mxu0 0.0
    %1143 = vmatpush1.msra.mxu0 0.0
    %1144 = vmatprep.subr.mxu0 0.0
    %1145 = vmatpush1.msra.mxu0 0.0
    %1146 = vmatprep.subr.mxu0 0.0
    %1147 = vmatpush1.msra.mxu0 0.0
    %1148 = vmatprep.subr.mxu0 0.0
    %1149 = vmatpush1.msra.mxu0 0.0
    %1150 = vmatprep.subr.mxu0 0.0
    %1151 = vmatpush1.msra.mxu0 0.0
    %1152 = vmatprep.subr.mxu0 0.0
    %1153 = vmatpush1.msra.mxu0 0.0
    %1154 = vmatprep.subr.mxu0 0.0
    %1155 = vmatpush1.msra.mxu0 0.0
    %1156 = vmatprep.subr.mxu0 0.0
    %1157 = vmatpush1.msra.mxu0 0.0
    %1158 = vmatprep.subr.mxu0 0.0
    %1159 = vmatpush1.msra.mxu0 0.0
    %1160 = vmatprep.mubr.f32.mxu0 0.0
    %v1161 = vand.u32 %v44, 4294901760
    %v1162 = vsub.f32 %v44, %v1161
    %v1163 = vand.u32 %v1162, 4294901760
    %1164 = vmatmul.mubr.f32.gmra.mrb[0].mxu0 %v1163
    %v1165 = vpop.f32.mrb[0].mxu0
    %v1166 = vadd.f32 %v940, %v1165
    %v1167 = vpop.f32.mrb[0].mxu0
    %v1168 = vadd.f32 %v942, %v1167
    %1169 = vmatprep.mubr.f32.mxu0 0.0
    %v1170 = vand.u32 %v45, 4294901760
    %v1171 = vsub.f32 %v45, %v1170
    %v1172 = vand.u32 %v1171, 4294901760
    %1173 = vmatmul.mubr.f32.gmra.mrb[0].mxu0 %v1172
    %v1174 = vpop.f32.mrb[0].mxu0
    %v1175 = vadd.f32 %v948, %v1174
    %v1176 = vpop.f32.mrb[0].mxu0
    %v1177 = vadd.f32 %v950, %v1176
    %1178 = vmatprep.mubr.f32.mxu0 0.0
    %v1179 = vand.u32 %v46, 4294901760
    %v1180 = vsub.f32 %v46, %v1179
    %v1181 = vand.u32 %v1180, 4294901760
    %1182 = vmatmul.mubr.f32.gmra.mrb[0].mxu0 %v1181
    %v1183 = vpop.f32.mrb[0].mxu0
    %v1184 = vadd.f32 %v956, %v1183
    %v1185 = vpop.f32.mrb[0].mxu0
    %v1186 = vadd.f32 %v958, %v1185
    %1187 = vmatprep.mubr.f32.mxu0 0.0
    %v1188 = vand.u32 %v47, 4294901760
    %v1189 = vsub.f32 %v47, %v1188
    %v1190 = vand.u32 %v1189, 4294901760
    %1191 = vmatmul.mubr.f32.gmra.mrb[0].mxu0 %v1190
    %v1192 = vpop.f32.mrb[0].mxu0
    %v1193 = vadd.f32 %v964, %v1192
    %v1194 = vpop.f32.mrb[0].mxu0
    %v1195 = vadd.f32 %v966, %v1194
    %1196 = vmatprep.mubr.f32.mxu0 0.0
    %v1197 = vand.u32 %v48, 4294901760
    %v1198 = vsub.f32 %v48, %v1197
    %v1199 = vand.u32 %v1198, 4294901760
    %1200 = vmatmul.mubr.f32.gmra.mrb[0].mxu0 %v1199
    %v1201 = vpop.f32.mrb[0].mxu0
    %v1202 = vadd.f32 %v972, %v1201
    %v1203 = vpop.f32.mrb[0].mxu0
    %v1204 = vadd.f32 %v974, %v1203
    %1205 = vmatprep.mubr.f32.mxu0 0.0
    %v1206 = vand.u32 %v49, 4294901760
    %v1207 = vsub.f32 %v49, %v1206
    %v1208 = vand.u32 %v1207, 4294901760
    %1209 = vmatmul.mubr.f32.gmra.mrb[0].mxu0 %v1208
    %v1210 = vpop.f32.mrb[0].mxu0
    %v1211 = vadd.f32 %v980, %v1210
    %v1212 = vpop.f32.mrb[0].mxu0
    %v1213 = vadd.f32 %v982, %v1212
    %1214 = vmatprep.mubr.f32.mxu0 0.0
    %v1215 = vand.u32 %v50, 4294901760
    %v1216 = vsub.f32 %v50, %v1215
    %v1217 = vand.u32 %v1216, 4294901760
    %1218 = vmatmul.mubr.f32.gmra.mrb[0].mxu0 %v1217
    %v1219 = vpop.f32.mrb[0].mxu0
    %v1220 = vadd.f32 %v988, %v1219
    %v1221 = vpop.f32.mrb[0].mxu0
    %v1222 = vadd.f32 %v990, %v1221
    %1223 = vmatprep.mubr.f32.mxu0 0.0
    %v1224 = vand.u32 %v51, 4294901760
    %v1225 = vsub.f32 %v51, %v1224
    %v1226 = vand.u32 %v1225, 4294901760
    %1227 = vmatmul.mubr.f32.gmra.mrb[0].mxu0 %v1226
    %v1228 = vpop.f32.mrb[0].mxu0
    %v1229 = vadd.f32 %v996, %v1228
    %v1230 = vpop.f32.mrb[0].mxu0
    %v1231 = vadd.f32 %v998, %v1230
    %1232 = vmatprep.mubr.f32.mxu0 0.0
    %v1233 = vand.u32 %v52, 4294901760
    %v1234 = vsub.f32 %v52, %v1233
    %v1235 = vand.u32 %v1234, 4294901760
    %1236 = vmatmul.mubr.f32.gmra.mrb[0].mxu0 %v1235
    %v1237 = vpop.f32.mrb[0].mxu0
    %v1238 = vadd.f32 %v1004, %v1237
    %v1239 = vpop.f32.mrb[0].mxu0
    %v1240 = vadd.f32 %v1006, %v1239
    %1241 = vmatprep.mubr.f32.mxu0 0.0
    %v1242 = vand.u32 %v53, 4294901760
    %v1243 = vsub.f32 %v53, %v1242
    %v1244 = vand.u32 %v1243, 4294901760
    %1245 = vmatmul.mubr.f32.gmra.mrb[0].mxu0 %v1244
    %v1246 = vpop.f32.mrb[0].mxu0
    %v1247 = vadd.f32 %v1012, %v1246
    %v1248 = vpop.f32.mrb[0].mxu0
    %v1249 = vadd.f32 %v1014, %v1248
    %1250 = vmatprep.mubr.f32.mxu0 0.0
    %v1251 = vand.u32 %v54, 4294901760
    %v1252 = vsub.f32 %v54, %v1251
    %v1253 = vand.u32 %v1252, 4294901760
    %1254 = vmatmul.mubr.f32.gmra.mrb[0].mxu0 %v1253
    %v1255 = vpop.f32.mrb[0].mxu0
    %v1256 = vadd.f32 %v1020, %v1255
    %v1257 = vpop.f32.mrb[0].mxu0
    %v1258 = vadd.f32 %v1022, %v1257
    %1259 = vmatprep.mubr.f32.mxu0 0.0
    %v1260 = vand.u32 %v55, 4294901760
    %v1261 = vsub.f32 %v55, %v1260
    %v1262 = vand.u32 %v1261, 4294901760
    %1263 = vmatmul.mubr.f32.gmra.mrb[0].mxu0 %v1262
    %v1264 = vpop.f32.mrb[0].mxu0
    %v1265 = vadd.f32 %v1028, %v1264
    %v1266 = vpop.f32.mrb[0].mxu0
    %v1267 = vadd.f32 %v1030, %v1266
    %1268 = vmatprep.mubr.f32.mxu0 0.0
    %v1269 = vand.u32 %v56, 4294901760
    %v1270 = vsub.f32 %v56, %v1269
    %v1271 = vand.u32 %v1270, 4294901760
    %1272 = vmatmul.mubr.f32.gmra.mrb[0].mxu0 %v1271
    %v1273 = vpop.f32.mrb[0].mxu0
    %v1274 = vadd.f32 %v1036, %v1273
    %v1275 = vpop.f32.mrb[0].mxu0
    %v1276 = vadd.f32 %v1038, %v1275
    %1277 = vmatprep.mubr.f32.mxu0 0.0
    %v1278 = vand.u32 %v57, 4294901760
    %v1279 = vsub.f32 %v57, %v1278
    %v1280 = vand.u32 %v1279, 4294901760
    %1281 = vmatmul.mubr.f32.gmra.mrb[0].mxu0 %v1280
    %v1282 = vpop.f32.mrb[0].mxu0
    %v1283 = vadd.f32 %v1044, %v1282
    %v1284 = vpop.f32.mrb[0].mxu0
    %v1285 = vadd.f32 %v1046, %v1284
    %1286 = vmatprep.mubr.f32.mxu0 0.0
    %v1287 = vand.u32 %v58, 4294901760
    %v1288 = vsub.f32 %v58, %v1287
    %v1289 = vand.u32 %v1288, 4294901760
    %1290 = vmatmul.mubr.f32.gmra.mrb[0].mxu0 %v1289
    %v1291 = vpop.f32.mrb[0].mxu0
    %v1292 = vadd.f32 %v1052, %v1291
    %v1293 = vpop.f32.mrb[0].mxu0
    %v1294 = vadd.f32 %v1054, %v1293
    %1295 = vmatprep.mubr.f32.mxu0 0.0
    %v1296 = vand.u32 %v59, 4294901760
    %v1297 = vsub.f32 %v59, %v1296
    %v1298 = vand.u32 %v1297, 4294901760
    %1299 = vmatmul.mubr.f32.gmra.mrb[0].mxu0 %v1298
    %v1300 = vpop.f32.mrb[0].mxu0
    %v1301 = vadd.f32 %v1060, %v1300
    %v1302 = vpop.f32.mrb[0].mxu0
    %v1303 = vadd.f32 %v1062, %v1302
    %1304 = vdwg.mxu0
    %v1305 = vand.u32 %v86, 4294901760
    %v1306 = vsub.f32 %v86, %v1305
    %v1307 = vand.u32 %v1306, 4294901760
    %1308 = vmatprep.subr.mxu0 %v1307
    %v1309 = vand.u32 %v85, 4294901760
    %v1310 = vsub.f32 %v85, %v1309
    %v1311 = vand.u32 %v1310, 4294901760
    %1312 = vmatpush1.msra.mxu0 %v1311
    %v1313 = vand.u32 %v88, 4294901760
    %v1314 = vsub.f32 %v88, %v1313
    %v1315 = vand.u32 %v1314, 4294901760
    %1316 = vmatprep.subr.mxu0 %v1315
    %v1317 = vand.u32 %v87, 4294901760
    %v1318 = vsub.f32 %v87, %v1317
    %v1319 = vand.u32 %v1318, 4294901760
    %1320 = vmatpush1.msra.mxu0 %v1319
    %v1321 = vand.u32 %v90, 4294901760
    %v1322 = vsub.f32 %v90, %v1321
    %v1323 = vand.u32 %v1322, 4294901760
    %1324 = vmatprep.subr.mxu0 %v1323
    %v1325 = vand.u32 %v89, 4294901760
    %v1326 = vsub.f32 %v89, %v1325
    %v1327 = vand.u32 %v1326, 4294901760
    %1328 = vmatpush1.msra.mxu0 %v1327
    %v1329 = vand.u32 %v92, 4294901760
    %v1330 = vsub.f32 %v92, %v1329
    %v1331 = vand.u32 %v1330, 4294901760
    %1332 = vmatprep.subr.mxu0 %v1331
    %v1333 = vand.u32 %v91, 4294901760
    %v1334 = vsub.f32 %v91, %v1333
    %v1335 = vand.u32 %v1334, 4294901760
    %1336 = vmatpush1.msra.mxu0 %v1335
    %v1337 = vand.u32 %v94, 4294901760
    %v1338 = vsub.f32 %v94, %v1337
    %v1339 = vand.u32 %v1338, 4294901760
    %1340 = vmatprep.subr.mxu0 %v1339
    %v1341 = vand.u32 %v93, 4294901760
    %v1342 = vsub.f32 %v93, %v1341
    %v1343 = vand.u32 %v1342, 4294901760
    %1344 = vmatpush1.msra.mxu0 %v1343
    %v1345 = vand.u32 %v96, 4294901760
    %v1346 = vsub.f32 %v96, %v1345
    %v1347 = vand.u32 %v1346, 4294901760
    %1348 = vmatprep.subr.mxu0 %v1347
    %v1349 = vand.u32 %v95, 4294901760
    %v1350 = vsub.f32 %v95, %v1349
    %v1351 = vand.u32 %v1350, 4294901760
    %1352 = vmatpush1.msra.mxu0 %v1351
    %v1353 = vand.u32 %v98, 4294901760
    %v1354 = vsub.f32 %v98, %v1353
    %v1355 = vand.u32 %v1354, 4294901760
    %1356 = vmatprep.subr.mxu0 %v1355
    %v1357 = vand.u32 %v97, 4294901760
    %v1358 = vsub.f32 %v97, %v1357
    %v1359 = vand.u32 %v1358, 4294901760
    %1360 = vmatpush1.msra.mxu0 %v1359
    %v1361 = vand.u32 %v100, 4294901760
    %v1362 = vsub.f32 %v100, %v1361
    %v1363 = vand.u32 %v1362, 4294901760
    %1364 = vmatprep.subr.mxu0 %v1363
    %v1365 = vand.u32 %v99, 4294901760
    %v1366 = vsub.f32 %v99, %v1365
    %v1367 = vand.u32 %v1366, 4294901760
    %1368 = vmatpush1.msra.mxu0 %v1367
    %v1369 = vand.u32 %v102, 4294901760
    %v1370 = vsub.f32 %v102, %v1369
    %v1371 = vand.u32 %v1370, 4294901760
    %1372 = vmatprep.subr.mxu0 %v1371
    %v1373 = vand.u32 %v101, 4294901760
    %v1374 = vsub.f32 %v101, %v1373
    %v1375 = vand.u32 %v1374, 4294901760
    %1376 = vmatpush1.msra.mxu0 %v1375
    %v1377 = vand.u32 %v104, 4294901760
    %v1378 = vsub.f32 %v104, %v1377
    %v1379 = vand.u32 %v1378, 4294901760
    %1380 = vmatprep.subr.mxu0 %v1379
    %v1381 = vand.u32 %v103, 4294901760
    %v1382 = vsub.f32 %v103, %v1381
    %v1383 = vand.u32 %v1382, 4294901760
    %1384 = vmatpush1.msra.mxu0 %v1383
    %v1385 = vand.u32 %v106, 4294901760
    %v1386 = vsub.f32 %v106, %v1385
    %v1387 = vand.u32 %v1386, 4294901760
    %1388 = vmatprep.subr.mxu0 %v1387
    %v1389 = vand.u32 %v105, 4294901760
    %v1390 = vsub.f32 %v105, %v1389
    %v1391 = vand.u32 %v1390, 4294901760
    %1392 = vmatpush1.msra.mxu0 %v1391
    %v1393 = vand.u32 %v108, 4294901760
    %v1394 = vsub.f32 %v108, %v1393
    %v1395 = vand.u32 %v1394, 4294901760
    %1396 = vmatprep.subr.mxu0 %v1395
    %v1397 = vand.u32 %v107, 4294901760
    %v1398 = vsub.f32 %v107, %v1397
    %v1399 = vand.u32 %v1398, 4294901760
    %1400 = vmatpush1.msra.mxu0 %v1399
    %v1401 = vand.u32 %v110, 4294901760
    %v1402 = vsub.f32 %v110, %v1401
    %v1403 = vand.u32 %v1402, 4294901760
    %1404 = vmatprep.subr.mxu0 %v1403
    %v1405 = vand.u32 %v109, 4294901760
    %v1406 = vsub.f32 %v109, %v1405
    %v1407 = vand.u32 %v1406, 4294901760
    %1408 = vmatpush1.msra.mxu0 %v1407
    %v1409 = vand.u32 %v112, 4294901760
    %v1410 = vsub.f32 %v112, %v1409
    %v1411 = vand.u32 %v1410, 4294901760
    %1412 = vmatprep.subr.mxu0 %v1411
    %v1413 = vand.u32 %v111, 4294901760
    %v1414 = vsub.f32 %v111, %v1413
    %v1415 = vand.u32 %v1414, 4294901760
    %1416 = vmatpush1.msra.mxu0 %v1415
    %v1417 = vand.u32 %v114, 4294901760
    %v1418 = vsub.f32 %v114, %v1417
    %v1419 = vand.u32 %v1418, 4294901760
    %1420 = vmatprep.subr.mxu0 %v1419
    %v1421 = vand.u32 %v113, 4294901760
    %v1422 = vsub.f32 %v113, %v1421
    %v1423 = vand.u32 %v1422, 4294901760
    %1424 = vmatpush1.msra.mxu0 %v1423
    %v1425 = vand.u32 %v116, 4294901760
    %v1426 = vsub.f32 %v116, %v1425
    %v1427 = vand.u32 %v1426, 4294901760
    %1428 = vmatprep.subr.mxu0 %v1427
    %v1429 = vand.u32 %v115, 4294901760
    %v1430 = vsub.f32 %v115, %v1429
    %v1431 = vand.u32 %v1430, 4294901760
    %1432 = vmatpush1.msra.mxu0 %v1431
    %1433 = vmatprep.subr.mxu0 0.0
    %1434 = vmatpush1.msra.mxu0 0.0
    %1435 = vmatprep.subr.mxu0 0.0
    %1436 = vmatpush1.msra.mxu0 0.0
    %1437 = vmatprep.subr.mxu0 0.0
    %1438 = vmatpush1.msra.mxu0 0.0
    %1439 = vmatprep.subr.mxu0 0.0
    %1440 = vmatpush1.msra.mxu0 0.0
    %1441 = vmatprep.subr.mxu0 0.0
    %1442 = vmatpush1.msra.mxu0 0.0
    %1443 = vmatprep.subr.mxu0 0.0
    %1444 = vmatpush1.msra.mxu0 0.0
    %1445 = vmatprep.subr.mxu0 0.0
    %1446 = vmatpush1.msra.mxu0 0.0
    %1447 = vmatprep.subr.mxu0 0.0
    %1448 = vmatpush1.msra.mxu0 0.0
    %1449 = vmatprep.subr.mxu0 0.0
    %1450 = vmatpush1.msra.mxu0 0.0
    %1451 = vmatprep.subr.mxu0 0.0
    %1452 = vmatpush1.msra.mxu0 0.0
    %1453 = vmatprep.subr.mxu0 0.0
    %1454 = vmatpush1.msra.mxu0 0.0
    %1455 = vmatprep.subr.mxu0 0.0
    %1456 = vmatpush1.msra.mxu0 0.0
    %1457 = vmatprep.subr.mxu0 0.0
    %1458 = vmatpush1.msra.mxu0 0.0
    %1459 = vmatprep.subr.mxu0 0.0
    %1460 = vmatpush1.msra.mxu0 0.0
    %1461 = vmatprep.subr.mxu0 0.0
    %1462 = vmatpush1.msra.mxu0 0.0
    %1463 = vmatprep.subr.mxu0 0.0
    %1464 = vmatpush1.msra.mxu0 0.0
    %1465 = vmatprep.mubr.f32.mxu0 0.0
    %v1466 = vand.u32 %v44, 4294901760
    %1467 = vmatmul.mubr.f32.gmra.mrb[0].mxu0 %v1466
    %v1468 = vpop.f32.mrb[0].mxu0
    %v1469 = vadd.f32 %v1166, %v1468
    %v1470 = vpop.f32.mrb[0].mxu0
    %v1471 = vadd.f32 %v1168, %v1470
    %1472 = vmatprep.mubr.f32.mxu0 0.0
    %v1473 = vand.u32 %v45, 4294901760
    %1474 = vmatmul.mubr.f32.gmra.mrb[0].mxu0 %v1473
    %v1475 = vpop.f32.mrb[0].mxu0
    %v1476 = vadd.f32 %v1175, %v1475
    %v1477 = vpop.f32.mrb[0].mxu0
    %v1478 = vadd.f32 %v1177, %v1477
    %1479 = vmatprep.mubr.f32.mxu0 0.0
    %v1480 = vand.u32 %v46, 4294901760
    %1481 = vmatmul.mubr.f32.gmra.mrb[0].mxu0 %v1480
    %v1482 = vpop.f32.mrb[0].mxu0
    %v1483 = vadd.f32 %v1184, %v1482
    %v1484 = vpop.f32.mrb[0].mxu0
    %v1485 = vadd.f32 %v1186, %v1484
    %1486 = vmatprep.mubr.f32.mxu0 0.0
    %v1487 = vand.u32 %v47, 4294901760
    %1488 = vmatmul.mubr.f32.gmra.mrb[0].mxu0 %v1487
    %v1489 = vpop.f32.mrb[0].mxu0
    %v1490 = vadd.f32 %v1193, %v1489
    %v1491 = vpop.f32.mrb[0].mxu0
    %v1492 = vadd.f32 %v1195, %v1491
    %1493 = vmatprep.mubr.f32.mxu0 0.0
    %v1494 = vand.u32 %v48, 4294901760
    %1495 = vmatmul.mubr.f32.gmra.mrb[0].mxu0 %v1494
    %v1496 = vpop.f32.mrb[0].mxu0
    %v1497 = vadd.f32 %v1202, %v1496
    %v1498 = vpop.f32.mrb[0].mxu0
    %v1499 = vadd.f32 %v1204, %v1498
    %1500 = vmatprep.mubr.f32.mxu0 0.0
    %v1501 = vand.u32 %v49, 4294901760
    %1502 = vmatmul.mubr.f32.gmra.mrb[0].mxu0 %v1501
    %v1503 = vpop.f32.mrb[0].mxu0
    %v1504 = vadd.f32 %v1211, %v1503
    %v1505 = vpop.f32.mrb[0].mxu0
    %v1506 = vadd.f32 %v1213, %v1505
    %1507 = vmatprep.mubr.f32.mxu0 0.0
    %v1508 = vand.u32 %v50, 4294901760
    %1509 = vmatmul.mubr.f32.gmra.mrb[0].mxu0 %v1508
    %v1510 = vpop.f32.mrb[0].mxu0
    %v1511 = vadd.f32 %v1220, %v1510
    %v1512 = vpop.f32.mrb[0].mxu0
    %v1513 = vadd.f32 %v1222, %v1512
    %1514 = vmatprep.mubr.f32.mxu0 0.0
    %v1515 = vand.u32 %v51, 4294901760
    %1516 = vmatmul.mubr.f32.gmra.mrb[0].mxu0 %v1515
    %v1517 = vpop.f32.mrb[0].mxu0
    %v1518 = vadd.f32 %v1229, %v1517
    %v1519 = vpop.f32.mrb[0].mxu0
    %v1520 = vadd.f32 %v1231, %v1519
    %1521 = vmatprep.mubr.f32.mxu0 0.0
    %v1522 = vand.u32 %v52, 4294901760
    %1523 = vmatmul.mubr.f32.gmra.mrb[0].mxu0 %v1522
    %v1524 = vpop.f32.mrb[0].mxu0
    %v1525 = vadd.f32 %v1238, %v1524
    %v1526 = vpop.f32.mrb[0].mxu0
    %v1527 = vadd.f32 %v1240, %v1526
    %1528 = vmatprep.mubr.f32.mxu0 0.0
    %v1529 = vand.u32 %v53, 4294901760
    %1530 = vmatmul.mubr.f32.gmra.mrb[0].mxu0 %v1529
    %v1531 = vpop.f32.mrb[0].mxu0
    %v1532 = vadd.f32 %v1247, %v1531
    %v1533 = vpop.f32.mrb[0].mxu0
    %v1534 = vadd.f32 %v1249, %v1533
    %1535 = vmatprep.mubr.f32.mxu0 0.0
    %v1536 = vand.u32 %v54, 4294901760
    %1537 = vmatmul.mubr.f32.gmra.mrb[0].mxu0 %v1536
    %v1538 = vpop.f32.mrb[0].mxu0
    %v1539 = vadd.f32 %v1256, %v1538
    %v1540 = vpop.f32.mrb[0].mxu0
    %v1541 = vadd.f32 %v1258, %v1540
    %1542 = vmatprep.mubr.f32.mxu0 0.0
    %v1543 = vand.u32 %v55, 4294901760
    %1544 = vmatmul.mubr.f32.gmra.mrb[0].mxu0 %v1543
    %v1545 = vpop.f32.mrb[0].mxu0
    %v1546 = vadd.f32 %v1265, %v1545
    %v1547 = vpop.f32.mrb[0].mxu0
    %v1548 = vadd.f32 %v1267, %v1547
    %1549 = vmatprep.mubr.f32.mxu0 0.0
    %v1550 = vand.u32 %v56, 4294901760
    %1551 = vmatmul.mubr.f32.gmra.mrb[0].mxu0 %v1550
    %v1552 = vpop.f32.mrb[0].mxu0
    %v1553 = vadd.f32 %v1274, %v1552
    %v1554 = vpop.f32.mrb[0].mxu0
    %v1555 = vadd.f32 %v1276, %v1554
    %1556 = vmatprep.mubr.f32.mxu0 0.0
    %v1557 = vand.u32 %v57, 4294901760
    %1558 = vmatmul.mubr.f32.gmra.mrb[0].mxu0 %v1557
    %v1559 = vpop.f32.mrb[0].mxu0
    %v1560 = vadd.f32 %v1283, %v1559
    %v1561 = vpop.f32.mrb[0].mxu0
    %v1562 = vadd.f32 %v1285, %v1561
    %1563 = vmatprep.mubr.f32.mxu0 0.0
    %v1564 = vand.u32 %v58, 4294901760
    %1565 = vmatmul.mubr.f32.gmra.mrb[0].mxu0 %v1564
    %v1566 = vpop.f32.mrb[0].mxu0
    %v1567 = vadd.f32 %v1292, %v1566
    %v1568 = vpop.f32.mrb[0].mxu0
    %v1569 = vadd.f32 %v1294, %v1568
    %1570 = vmatprep.mubr.f32.mxu0 0.0
    %v1571 = vand.u32 %v59, 4294901760
    %1572 = vmatmul.mubr.f32.gmra.mrb[0].mxu0 %v1571
    %v1573 = vpop.f32.mrb[0].mxu0
    %v1574 = vadd.f32 %v1301, %v1573
    %v1575 = vpop.f32.mrb[0].mxu0
    %v1576 = vadd.f32 %v1303, %v1575
    %1577 = vdwg.mxu0
    %v1578 = vand.u32 %v86, 4294901760
    %1579 = vmatprep.subr.mxu0 %v1578
    %v1580 = vand.u32 %v85, 4294901760
    %1581 = vmatpush1.msra.mxu0 %v1580
    %v1582 = vand.u32 %v88, 4294901760
    %1583 = vmatprep.subr.mxu0 %v1582
    %v1584 = vand.u32 %v87, 4294901760
    %1585 = vmatpush1.msra.mxu0 %v1584
    %v1586 = vand.u32 %v90, 4294901760
    %1587 = vmatprep.subr.mxu0 %v1586
    %v1588 = vand.u32 %v89, 4294901760
    %1589 = vmatpush1.msra.mxu0 %v1588
    %v1590 = vand.u32 %v92, 4294901760
    %1591 = vmatprep.subr.mxu0 %v1590
    %v1592 = vand.u32 %v91, 4294901760
    %1593 = vmatpush1.msra.mxu0 %v1592
    %v1594 = vand.u32 %v94, 4294901760
    %1595 = vmatprep.subr.mxu0 %v1594
    %v1596 = vand.u32 %v93, 4294901760
    %1597 = vmatpush1.msra.mxu0 %v1596
    %v1598 = vand.u32 %v96, 4294901760
    %1599 = vmatprep.subr.mxu0 %v1598
    %v1600 = vand.u32 %v95, 4294901760
    %1601 = vmatpush1.msra.mxu0 %v1600
    %v1602 = vand.u32 %v98, 4294901760
    %1603 = vmatprep.subr.mxu0 %v1602
    %v1604 = vand.u32 %v97, 4294901760
    %1605 = vmatpush1.msra.mxu0 %v1604
    %v1606 = vand.u32 %v100, 4294901760
    %1607 = vmatprep.subr.mxu0 %v1606
    %v1608 = vand.u32 %v99, 4294901760
    %1609 = vmatpush1.msra.mxu0 %v1608
    %v1610 = vand.u32 %v102, 4294901760
    %1611 = vmatprep.subr.mxu0 %v1610
    %v1612 = vand.u32 %v101, 4294901760
    %1613 = vmatpush1.msra.mxu0 %v1612
    %v1614 = vand.u32 %v104, 4294901760
    %1615 = vmatprep.subr.mxu0 %v1614
    %v1616 = vand.u32 %v103, 4294901760
    %1617 = vmatpush1.msra.mxu0 %v1616
    %v1618 = vand.u32 %v106, 4294901760
    %1619 = vmatprep.subr.mxu0 %v1618
    %v1620 = vand.u32 %v105, 4294901760
    %1621 = vmatpush1.msra.mxu0 %v1620
    %v1622 = vand.u32 %v108, 4294901760
    %1623 = vmatprep.subr.mxu0 %v1622
    %v1624 = vand.u32 %v107, 4294901760
    %1625 = vmatpush1.msra.mxu0 %v1624
    %v1626 = vand.u32 %v110, 4294901760
    %1627 = vmatprep.subr.mxu0 %v1626
    %v1628 = vand.u32 %v109, 4294901760
    %1629 = vmatpush1.msra.mxu0 %v1628
    %v1630 = vand.u32 %v112, 4294901760
    %1631 = vmatprep.subr.mxu0 %v1630
    %v1632 = vand.u32 %v111, 4294901760
    %1633 = vmatpush1.msra.mxu0 %v1632
    %v1634 = vand.u32 %v114, 4294901760
    %1635 = vmatprep.subr.mxu0 %v1634
    %v1636 = vand.u32 %v113, 4294901760
    %1637 = vmatpush1.msra.mxu0 %v1636
    %v1638 = vand.u32 %v116, 4294901760
    %1639 = vmatprep.subr.mxu0 %v1638
    %v1640 = vand.u32 %v115, 4294901760
    %1641 = vmatpush1.msra.mxu0 %v1640
    %1642 = vmatprep.subr.mxu0 0.0
    %1643 = vmatpush1.msra.mxu0 0.0
    %1644 = vmatprep.subr.mxu0 0.0
    %1645 = vmatpush1.msra.mxu0 0.0
    %1646 = vmatprep.subr.mxu0 0.0
    %1647 = vmatpush1.msra.mxu0 0.0
    %1648 = vmatprep.subr.mxu0 0.0
    %1649 = vmatpush1.msra.mxu0 0.0
    %1650 = vmatprep.subr.mxu0 0.0
    %1651 = vmatpush1.msra.mxu0 0.0
    %1652 = vmatprep.subr.mxu0 0.0
    %1653 = vmatpush1.msra.mxu0 0.0
    %1654 = vmatprep.subr.mxu0 0.0
    %1655 = vmatpush1.msra.mxu0 0.0
    %1656 = vmatprep.subr.mxu0 0.0
    %1657 = vmatpush1.msra.mxu0 0.0
    %1658 = vmatprep.subr.mxu0 0.0
    %1659 = vmatpush1.msra.mxu0 0.0
    %1660 = vmatprep.subr.mxu0 0.0
    %1661 = vmatpush1.msra.mxu0 0.0
    %1662 = vmatprep.subr.mxu0 0.0
    %1663 = vmatpush1.msra.mxu0 0.0
    %1664 = vmatprep.subr.mxu0 0.0
    %1665 = vmatpush1.msra.mxu0 0.0
    %1666 = vmatprep.subr.mxu0 0.0
    %1667 = vmatpush1.msra.mxu0 0.0
    %1668 = vmatprep.subr.mxu0 0.0
    %1669 = vmatpush1.msra.mxu0 0.0
    %1670 = vmatprep.subr.mxu0 0.0
    %1671 = vmatpush1.msra.mxu0 0.0
    %1672 = vmatprep.subr.mxu0 0.0
    %1673 = vmatpush1.msra.mxu0 0.0
    %1674 = vmatprep.mubr.f32.mxu0 0.0
    %v1675 = vand.u32 %v44, 4294901760
    %1676 = vmatmul.mubr.f32.gmra.mrb[0].mxu0 %v1675
    %v1677 = vpop.f32.mrb[0].mxu0
    %v1678 = vadd.f32 %v1469, %v1677
    %v1679 = vpop.f32.mrb[0].mxu0
    %v1680 = vadd.f32 %v1471, %v1679
    %1681 = vmatprep.mubr.f32.mxu0 0.0
    %v1682 = vand.u32 %v45, 4294901760
    %1683 = vmatmul.mubr.f32.gmra.mrb[0].mxu0 %v1682
    %v1684 = vpop.f32.mrb[0].mxu0
    %v1685 = vadd.f32 %v1476, %v1684
    %v1686 = vpop.f32.mrb[0].mxu0
    %v1687 = vadd.f32 %v1478, %v1686
    %1688 = vmatprep.mubr.f32.mxu0 0.0
    %v1689 = vand.u32 %v46, 4294901760
    %1690 = vmatmul.mubr.f32.gmra.mrb[0].mxu0 %v1689
    %v1691 = vpop.f32.mrb[0].mxu0
    %v1692 = vadd.f32 %v1483, %v1691
    %v1693 = vpop.f32.mrb[0].mxu0
    %v1694 = vadd.f32 %v1485, %v1693
    %1695 = vmatprep.mubr.f32.mxu0 0.0
    %v1696 = vand.u32 %v47, 4294901760
    %1697 = vmatmul.mubr.f32.gmra.mrb[0].mxu0 %v1696
    %v1698 = vpop.f32.mrb[0].mxu0
    %v1699 = vadd.f32 %v1490, %v1698
    %v1700 = vpop.f32.mrb[0].mxu0
    %v1701 = vadd.f32 %v1492, %v1700
    %1702 = vmatprep.mubr.f32.mxu0 0.0
    %v1703 = vand.u32 %v48, 4294901760
    %1704 = vmatmul.mubr.f32.gmra.mrb[0].mxu0 %v1703
    %v1705 = vpop.f32.mrb[0].mxu0
    %v1706 = vadd.f32 %v1497, %v1705
    %v1707 = vpop.f32.mrb[0].mxu0
    %v1708 = vadd.f32 %v1499, %v1707
    %1709 = vmatprep.mubr.f32.mxu0 0.0
    %v1710 = vand.u32 %v49, 4294901760
    %1711 = vmatmul.mubr.f32.gmra.mrb[0].mxu0 %v1710
    %v1712 = vpop.f32.mrb[0].mxu0
    %v1713 = vadd.f32 %v1504, %v1712
    %v1714 = vpop.f32.mrb[0].mxu0
    %v1715 = vadd.f32 %v1506, %v1714
    %1716 = vmatprep.mubr.f32.mxu0 0.0
    %v1717 = vand.u32 %v50, 4294901760
    %1718 = vmatmul.mubr.f32.gmra.mrb[0].mxu0 %v1717
    %v1719 = vpop.f32.mrb[0].mxu0
    %v1720 = vadd.f32 %v1511, %v1719
    %v1721 = vpop.f32.mrb[0].mxu0
    %v1722 = vadd.f32 %v1513, %v1721
    %1723 = vmatprep.mubr.f32.mxu0 0.0
    %v1724 = vand.u32 %v51, 4294901760
    %1725 = vmatmul.mubr.f32.gmra.mrb[0].mxu0 %v1724
    %v1726 = vpop.f32.mrb[0].mxu0
    %v1727 = vadd.f32 %v1518, %v1726
    %v1728 = vpop.f32.mrb[0].mxu0
    %v1729 = vadd.f32 %v1520, %v1728
    %1730 = vmatprep.mubr.f32.mxu0 0.0
    %v1731 = vand.u32 %v52, 4294901760
    %1732 = vmatmul.mubr.f32.gmra.mrb[0].mxu0 %v1731
    %v1733 = vpop.f32.mrb[0].mxu0
    %v1734 = vadd.f32 %v1525, %v1733
    %v1735 = vpop.f32.mrb[0].mxu0
    %v1736 = vadd.f32 %v1527, %v1735
    %1737 = vmatprep.mubr.f32.mxu0 0.0
    %v1738 = vand.u32 %v53, 4294901760
    %1739 = vmatmul.mubr.f32.gmra.mrb[0].mxu0 %v1738
    %v1740 = vpop.f32.mrb[0].mxu0
    %v1741 = vadd.f32 %v1532, %v1740
    %v1742 = vpop.f32.mrb[0].mxu0
    %v1743 = vadd.f32 %v1534, %v1742
    %1744 = vmatprep.mubr.f32.mxu0 0.0
    %v1745 = vand.u32 %v54, 4294901760
    %1746 = vmatmul.mubr.f32.gmra.mrb[0].mxu0 %v1745
    %v1747 = vpop.f32.mrb[0].mxu0
    %v1748 = vadd.f32 %v1539, %v1747
    %v1749 = vpop.f32.mrb[0].mxu0
    %v1750 = vadd.f32 %v1541, %v1749
    %1751 = vmatprep.mubr.f32.mxu0 0.0
    %v1752 = vand.u32 %v55, 4294901760
    %1753 = vmatmul.mubr.f32.gmra.mrb[0].mxu0 %v1752
    %v1754 = vpop.f32.mrb[0].mxu0
    %v1755 = vadd.f32 %v1546, %v1754
    %v1756 = vpop.f32.mrb[0].mxu0
    %v1757 = vadd.f32 %v1548, %v1756
    %1758 = vmatprep.mubr.f32.mxu0 0.0
    %v1759 = vand.u32 %v56, 4294901760
    %1760 = vmatmul.mubr.f32.gmra.mrb[0].mxu0 %v1759
    %v1761 = vpop.f32.mrb[0].mxu0
    %v1762 = vadd.f32 %v1553, %v1761
    %v1763 = vpop.f32.mrb[0].mxu0
    %v1764 = vadd.f32 %v1555, %v1763
    %1765 = vmatprep.mubr.f32.mxu0 0.0
    %v1766 = vand.u32 %v57, 4294901760
    %1767 = vmatmul.mubr.f32.gmra.mrb[0].mxu0 %v1766
    %v1768 = vpop.f32.mrb[0].mxu0
    %v1769 = vadd.f32 %v1560, %v1768
    %v1770 = vpop.f32.mrb[0].mxu0
    %v1771 = vadd.f32 %v1562, %v1770
    %1772 = vmatprep.mubr.f32.mxu0 0.0
    %v1773 = vand.u32 %v58, 4294901760
    %1774 = vmatmul.mubr.f32.gmra.mrb[0].mxu0 %v1773
    %v1775 = vpop.f32.mrb[0].mxu0
    %v1776 = vadd.f32 %v1567, %v1775
    %v1777 = vpop.f32.mrb[0].mxu0
    %v1778 = vadd.f32 %v1569, %v1777
    %1779 = vmatprep.mubr.f32.mxu0 0.0
    %v1780 = vand.u32 %v59, 4294901760
    %1781 = vmatmul.mubr.f32.gmra.mrb[0].mxu0 %v1780
    %v1782 = vpop.f32.mrb[0].mxu0
    %v1783 = vadd.f32 %v1574, %v1782
    %v1784 = vpop.f32.mrb[0].mxu0
    %v1785 = vadd.f32 %v1576, %v1784
    %1786 = vdwg.mxu0
    %1787 = vrot.lane.b32.xlu0 %v85, 1
    %v1788 = vpop.permute.xlu0 %1787
    %1789 = vrot.lane.b32.xlu0 %v87, 1
    %v1790 = vpop.permute.xlu0 %1789
    %1791 = vrot.lane.b32.xlu0 %v89, 1
    %v1792 = vpop.permute.xlu0 %1791
    %1793 = vrot.lane.b32.xlu0 %v91, 1
    %v1794 = vpop.permute.xlu0 %1793
    %1795 = vrot.lane.b32.xlu0 %v93, 1
    %v1796 = vpop.permute.xlu0 %1795
    %1797 = vrot.lane.b32.xlu0 %v95, 1
    %v1798 = vpop.permute.xlu0 %1797
    %1799 = vrot.lane.b32.xlu0 %v97, 1
    %v1800 = vpop.permute.xlu0 %1799
    %1801 = vrot.lane.b32.xlu0 %v99, 1
    %v1802 = vpop.permute.xlu0 %1801
    %1803 = vrot.lane.b32.xlu0 %v101, 1
    %v1804 = vpop.permute.xlu0 %1803
    %1805 = vrot.lane.b32.xlu0 %v103, 1
    %v1806 = vpop.permute.xlu0 %1805
    %1807 = vrot.lane.b32.xlu0 %v105, 1
    %v1808 = vpop.permute.xlu0 %1807
    %1809 = vrot.lane.b32.xlu0 %v107, 1
    %v1810 = vpop.permute.xlu0 %1809
    %1811 = vrot.lane.b32.xlu0 %v109, 1
    %v1812 = vpop.permute.xlu0 %1811
    %1813 = vrot.lane.b32.xlu0 %v111, 1
    %v1814 = vpop.permute.xlu0 %1813
    %1815 = vrot.lane.b32.xlu0 %v113, 1
    %v1816 = vpop.permute.xlu0 %1815
    %1817 = vrot.lane.b32.xlu0 %v115, 1
    %v1818 = vpop.permute.xlu0 %1817
    %1819 = vrot.lane.b32.xlu0 %v86, 1
    %v1820 = vpop.permute.xlu0 %1819
    %1821 = vrot.lane.b32.xlu0 %v88, 1
    %v1822 = vpop.permute.xlu0 %1821
    %1823 = vrot.lane.b32.xlu0 %v90, 1
    %v1824 = vpop.permute.xlu0 %1823
    %1825 = vrot.lane.b32.xlu0 %v92, 1
    %v1826 = vpop.permute.xlu0 %1825
    %1827 = vrot.lane.b32.xlu0 %v94, 1
    %v1828 = vpop.permute.xlu0 %1827
    %1829 = vrot.lane.b32.xlu0 %v96, 1
    %v1830 = vpop.permute.xlu0 %1829
    %1831 = vrot.lane.b32.xlu0 %v98, 1
    %v1832 = vpop.permute.xlu0 %1831
    %1833 = vrot.lane.b32.xlu0 %v100, 1
    %v1834 = vpop.permute.xlu0 %1833
    %1835 = vrot.lane.b32.xlu0 %v102, 1
    %v1836 = vpop.permute.xlu0 %1835
    %1837 = vrot.lane.b32.xlu0 %v104, 1
    %v1838 = vpop.permute.xlu0 %1837
    %1839 = vrot.lane.b32.xlu0 %v106, 1
    %v1840 = vpop.permute.xlu0 %1839
    %1841 = vrot.lane.b32.xlu0 %v108, 1
    %v1842 = vpop.permute.xlu0 %1841
    %1843 = vrot.lane.b32.xlu0 %v110, 1
    %v1844 = vpop.permute.xlu0 %1843
    %1845 = vrot.lane.b32.xlu0 %v112, 1
    %v1846 = vpop.permute.xlu0 %1845
    %1847 = vrot.lane.b32.xlu0 %v114, 1
    %v1848 = vpop.permute.xlu0 %1847
    %1849 = vrot.lane.b32.xlu0 %v116, 1
    %v1850 = vpop.permute.xlu0 %1849
    %v1851 = vlaneseq
    %v1852 = vand.u32 %v1851, 127
    %vm1853 = vcmp.lt.s32.totalorder %v1852, 1
    %v1854 = vsel %vm1853, %v1788, %v1820
    %v1855 = vsel %vm1853, %v1790, %v1822
    %v1856 = vsel %vm1853, %v1792, %v1824
    %v1857 = vsel %vm1853, %v1794, %v1826
    %v1858 = vsel %vm1853, %v1796, %v1828
    %v1859 = vsel %vm1853, %v1798, %v1830
    %v1860 = vsel %vm1853, %v1800, %v1832
    %v1861 = vsel %vm1853, %v1802, %v1834
    %v1862 = vsel %vm1853, %v1804, %v1836
    %v1863 = vsel %vm1853, %v1806, %v1838
    %v1864 = vsel %vm1853, %v1808, %v1840
    %v1865 = vsel %vm1853, %v1810, %v1842
    %v1866 = vsel %vm1853, %v1812, %v1844
    %v1867 = vsel %vm1853, %v1814, %v1846
    %v1868 = vsel %vm1853, %v1816, %v1848
    %v1869 = vsel %vm1853, %v1818, %v1850
    %v1870 = vsel %vm1853, %v1820, %v1788
    %v1871 = vsel %vm1853, %v1822, %v1790
    %v1872 = vsel %vm1853, %v1824, %v1792
    %v1873 = vsel %vm1853, %v1826, %v1794
    %v1874 = vsel %vm1853, %v1828, %v1796
    %v1875 = vsel %vm1853, %v1830, %v1798
    %v1876 = vsel %vm1853, %v1832, %v1800
    %v1877 = vsel %vm1853, %v1834, %v1802
    %v1878 = vsel %vm1853, %v1836, %v1804
    %v1879 = vsel %vm1853, %v1838, %v1806
    %v1880 = vsel %vm1853, %v1840, %v1808
    %v1881 = vsel %vm1853, %v1842, %v1810
    %v1882 = vsel %vm1853, %v1844, %v1812
    %v1883 = vsel %vm1853, %v1846, %v1814
    %v1884 = vsel %vm1853, %v1848, %v1816
    %v1885 = vsel %vm1853, %v1850, %v1818
    %1886 = vrot.lane.b32.xlu0 %v85, 127
    %v1887 = vpop.permute.xlu0 %1886
    %1888 = vrot.lane.b32.xlu0 %v87, 127
    %v1889 = vpop.permute.xlu0 %1888
    %1890 = vrot.lane.b32.xlu0 %v89, 127
    %v1891 = vpop.permute.xlu0 %1890
    %1892 = vrot.lane.b32.xlu0 %v91, 127
    %v1893 = vpop.permute.xlu0 %1892
    %1894 = vrot.lane.b32.xlu0 %v93, 127
    %v1895 = vpop.permute.xlu0 %1894
    %1896 = vrot.lane.b32.xlu0 %v95, 127
    %v1897 = vpop.permute.xlu0 %1896
    %1898 = vrot.lane.b32.xlu0 %v97, 127
    %v1899 = vpop.permute.xlu0 %1898
    %1900 = vrot.lane.b32.xlu0 %v99, 127
    %v1901 = vpop.permute.xlu0 %1900
    %1902 = vrot.lane.b32.xlu0 %v101, 127
    %v1903 = vpop.permute.xlu0 %1902
    %1904 = vrot.lane.b32.xlu0 %v103, 127
    %v1905 = vpop.permute.xlu0 %1904
    %1906 = vrot.lane.b32.xlu0 %v105, 127
    %v1907 = vpop.permute.xlu0 %1906
    %1908 = vrot.lane.b32.xlu0 %v107, 127
    %v1909 = vpop.permute.xlu0 %1908
    %1910 = vrot.lane.b32.xlu0 %v109, 127
    %v1911 = vpop.permute.xlu0 %1910
    %1912 = vrot.lane.b32.xlu0 %v111, 127
    %v1913 = vpop.permute.xlu0 %1912
    %1914 = vrot.lane.b32.xlu0 %v113, 127
    %v1915 = vpop.permute.xlu0 %1914
    %1916 = vrot.lane.b32.xlu0 %v115, 127
    %v1917 = vpop.permute.xlu0 %1916
    %1918 = vrot.lane.b32.xlu0 %v86, 127
    %v1919 = vpop.permute.xlu0 %1918
    %1920 = vrot.lane.b32.xlu0 %v88, 127
    %v1921 = vpop.permute.xlu0 %1920
    %1922 = vrot.lane.b32.xlu0 %v90, 127
    %v1923 = vpop.permute.xlu0 %1922
    %1924 = vrot.lane.b32.xlu0 %v92, 127
    %v1925 = vpop.permute.xlu0 %1924
    %1926 = vrot.lane.b32.xlu0 %v94, 127
    %v1927 = vpop.permute.xlu0 %1926
    %1928 = vrot.lane.b32.xlu0 %v96, 127
    %v1929 = vpop.permute.xlu0 %1928
    %1930 = vrot.lane.b32.xlu0 %v98, 127
    %v1931 = vpop.permute.xlu0 %1930
    %1932 = vrot.lane.b32.xlu0 %v100, 127
    %v1933 = vpop.permute.xlu0 %1932
    %1934 = vrot.lane.b32.xlu0 %v102, 127
    %v1935 = vpop.permute.xlu0 %1934
    %1936 = vrot.lane.b32.xlu0 %v104, 127
    %v1937 = vpop.permute.xlu0 %1936
    %1938 = vrot.lane.b32.xlu0 %v106, 127
    %v1939 = vpop.permute.xlu0 %1938
    %1940 = vrot.lane.b32.xlu0 %v108, 127
    %v1941 = vpop.permute.xlu0 %1940
    %1942 = vrot.lane.b32.xlu0 %v110, 127
    %v1943 = vpop.permute.xlu0 %1942
    %1944 = vrot.lane.b32.xlu0 %v112, 127
    %v1945 = vpop.permute.xlu0 %1944
    %1946 = vrot.lane.b32.xlu0 %v114, 127
    %v1947 = vpop.permute.xlu0 %1946
    %1948 = vrot.lane.b32.xlu0 %v116, 127
    %v1949 = vpop.permute.xlu0 %1948
    %vm1950 = vcmp.lt.s32.totalorder %v1852, 127
    %v1951 = vsel %vm1950, %v1887, %v1919
    %v1952 = vsel %vm1950, %v1889, %v1921
    %v1953 = vsel %vm1950, %v1891, %v1923
    %v1954 = vsel %vm1950, %v1893, %v1925
    %v1955 = vsel %vm1950, %v1895, %v1927
    %v1956 = vsel %vm1950, %v1897, %v1929
    %v1957 = vsel %vm1950, %v1899, %v1931
    %v1958 = vsel %vm1950, %v1901, %v1933
    %v1959 = vsel %vm1950, %v1903, %v1935
    %v1960 = vsel %vm1950, %v1905, %v1937
    %v1961 = vsel %vm1950, %v1907, %v1939
    %v1962 = vsel %vm1950, %v1909, %v1941
    %v1963 = vsel %vm1950, %v1911, %v1943
    %v1964 = vsel %vm1950, %v1913, %v1945
    %v1965 = vsel %vm1950, %v1915, %v1947
    %v1966 = vsel %vm1950, %v1917, %v1949
    %v1967 = vsel %vm1950, %v1919, %v1887
    %v1968 = vsel %vm1950, %v1921, %v1889
    %v1969 = vsel %vm1950, %v1923, %v1891
    %v1970 = vsel %vm1950, %v1925, %v1893
    %v1971 = vsel %vm1950, %v1927, %v1895
    %v1972 = vsel %vm1950, %v1929, %v1897
    %v1973 = vsel %vm1950, %v1931, %v1899
    %v1974 = vsel %vm1950, %v1933, %v1901
    %v1975 = vsel %vm1950, %v1935, %v1903
    %v1976 = vsel %vm1950, %v1937, %v1905
    %v1977 = vsel %vm1950, %v1939, %v1907
    %v1978 = vsel %vm1950, %v1941, %v1909
    %v1979 = vsel %vm1950, %v1943, %v1911
    %v1980 = vsel %vm1950, %v1945, %v1913
    %v1981 = vsel %vm1950, %v1947, %v1915
    %v1982 = vsel %vm1950, %v1949, %v1917
    %v1984 = vlaneseq
    %v1985 = vshrl.u32 %v1984, 7
    %v1986 = vsub.s32 0, %v1985
    %v1987 = vrot.slane %v76, %v1986
    %v1988 = vlaneseq
    %v1989 = vshrl.u32 %v1988, 7
    %v1990 = vsub.s32 1, %v1989
    %v1991 = vrot.slane %v76, %v1990
    %v1994 = vmul.f32 %v1987, %v1870
    %v1995 = vmul.f32 %v1991, %v1854
    %v1996 = vmul.f32 %v1987, %v1871
    %v1997 = vmul.f32 %v1991, %v1855
    %v1998 = vmul.f32 %v1987, %v1872
    %v1999 = vmul.f32 %v1991, %v1856
    %v2000 = vmul.f32 %v1987, %v1873
    %v2001 = vmul.f32 %v1991, %v1857
    %v2002 = vmul.f32 %v1987, %v1874
    %v2003 = vmul.f32 %v1991, %v1858
    %v2004 = vmul.f32 %v1987, %v1875
    %v2005 = vmul.f32 %v1991, %v1859
    %v2006 = vmul.f32 %v1987, %v1876
    %v2007 = vmul.f32 %v1991, %v1860
    %v2008 = vmul.f32 %v1987, %v1877
    %v2009 = vmul.f32 %v1991, %v1861
    %v2010 = vmul.f32 %v1987, %v1878
    %v2011 = vmul.f32 %v1991, %v1862
    %v2012 = vmul.f32 %v1987, %v1879
    %v2013 = vmul.f32 %v1991, %v1863
    %v2014 = vmul.f32 %v1987, %v1880
    %v2015 = vmul.f32 %v1991, %v1864
    %v2016 = vmul.f32 %v1987, %v1881
    %v2017 = vmul.f32 %v1991, %v1865
    %v2018 = vmul.f32 %v1987, %v1882
    %v2019 = vmul.f32 %v1991, %v1866
    %v2020 = vmul.f32 %v1987, %v1883
    %v2021 = vmul.f32 %v1991, %v1867
    %v2022 = vmul.f32 %v1987, %v1884
    %v2023 = vmul.f32 %v1991, %v1868
    %v2024 = vmul.f32 %v1987, %v1885
    %v2025 = vmul.f32 %v1991, %v1869
    %v2026 = vadd.f32 %v85, %v1994
    %v2027 = vadd.f32 %v86, %v1995
    %v2028 = vadd.f32 %v87, %v1996
    %v2029 = vadd.f32 %v88, %v1997
    %v2030 = vadd.f32 %v89, %v1998
    %v2031 = vadd.f32 %v90, %v1999
    %v2032 = vadd.f32 %v91, %v2000
    %v2033 = vadd.f32 %v92, %v2001
    %v2034 = vadd.f32 %v93, %v2002
    %v2035 = vadd.f32 %v94, %v2003
    %v2036 = vadd.f32 %v95, %v2004
    %v2037 = vadd.f32 %v96, %v2005
    %v2038 = vadd.f32 %v97, %v2006
    %v2039 = vadd.f32 %v98, %v2007
    %v2040 = vadd.f32 %v99, %v2008
    %v2041 = vadd.f32 %v100, %v2009
    %v2042 = vadd.f32 %v101, %v2010
    %v2043 = vadd.f32 %v102, %v2011
    %v2044 = vadd.f32 %v103, %v2012
    %v2045 = vadd.f32 %v104, %v2013
    %v2046 = vadd.f32 %v105, %v2014
    %v2047 = vadd.f32 %v106, %v2015
    %v2048 = vadd.f32 %v107, %v2016
    %v2049 = vadd.f32 %v108, %v2017
    %v2050 = vadd.f32 %v109, %v2018
    %v2051 = vadd.f32 %v110, %v2019
    %v2052 = vadd.f32 %v111, %v2020
    %v2053 = vadd.f32 %v112, %v2021
    %v2054 = vadd.f32 %v113, %v2022
    %v2055 = vadd.f32 %v114, %v2023
    %v2056 = vadd.f32 %v115, %v2024
    %v2057 = vadd.f32 %v116, %v2025
    %v2059 = vlaneseq
    %v2060 = vshrl.u32 %v2059, 7
    %v2061 = vsub.s32 0, %v2060
    %v2062 = vrot.slane %v78, %v2061
    %v2063 = vlaneseq
    %v2064 = vshrl.u32 %v2063, 7
    %v2065 = vsub.s32 1, %v2064
    %v2066 = vrot.slane %v78, %v2065
    %v2069 = vmul.f32 %v2062, %v1951
    %v2070 = vmul.f32 %v2066, %v1967
    %v2071 = vmul.f32 %v2062, %v1952
    %v2072 = vmul.f32 %v2066, %v1968
    %v2073 = vmul.f32 %v2062, %v1953
    %v2074 = vmul.f32 %v2066, %v1969
    %v2075 = vmul.f32 %v2062, %v1954
    %v2076 = vmul.f32 %v2066, %v1970
    %v2077 = vmul.f32 %v2062, %v1955
    %v2078 = vmul.f32 %v2066, %v1971
    %v2079 = vmul.f32 %v2062, %v1956
    %v2080 = vmul.f32 %v2066, %v1972
    %v2081 = vmul.f32 %v2062, %v1957
    %v2082 = vmul.f32 %v2066, %v1973
    %v2083 = vmul.f32 %v2062, %v1958
    %v2084 = vmul.f32 %v2066, %v1974
    %v2085 = vmul.f32 %v2062, %v1959
    %v2086 = vmul.f32 %v2066, %v1975
    %v2087 = vmul.f32 %v2062, %v1960
    %v2088 = vmul.f32 %v2066, %v1976
    %v2089 = vmul.f32 %v2062, %v1961
    %v2090 = vmul.f32 %v2066, %v1977
    %v2091 = vmul.f32 %v2062, %v1962
    %v2092 = vmul.f32 %v2066, %v1978
    %v2093 = vmul.f32 %v2062, %v1963
    %v2094 = vmul.f32 %v2066, %v1979
    %v2095 = vmul.f32 %v2062, %v1964
    %v2096 = vmul.f32 %v2066, %v1980
    %v2097 = vmul.f32 %v2062, %v1965
    %v2098 = vmul.f32 %v2066, %v1981
    %v2099 = vmul.f32 %v2062, %v1966
    %v2100 = vmul.f32 %v2066, %v1982
    %v2101 = vadd.f32 %v2026, %v2069
    %v2102 = vadd.f32 %v2027, %v2070
    %v2103 = vadd.f32 %v2028, %v2071
    %v2104 = vadd.f32 %v2029, %v2072
    %v2105 = vadd.f32 %v2030, %v2073
    %v2106 = vadd.f32 %v2031, %v2074
    %v2107 = vadd.f32 %v2032, %v2075
    %v2108 = vadd.f32 %v2033, %v2076
    %v2109 = vadd.f32 %v2034, %v2077
    %v2110 = vadd.f32 %v2035, %v2078
    %v2111 = vadd.f32 %v2036, %v2079
    %v2112 = vadd.f32 %v2037, %v2080
    %v2113 = vadd.f32 %v2038, %v2081
    %v2114 = vadd.f32 %v2039, %v2082
    %v2115 = vadd.f32 %v2040, %v2083
    %v2116 = vadd.f32 %v2041, %v2084
    %v2117 = vadd.f32 %v2042, %v2085
    %v2118 = vadd.f32 %v2043, %v2086
    %v2119 = vadd.f32 %v2044, %v2087
    %v2120 = vadd.f32 %v2045, %v2088
    %v2121 = vadd.f32 %v2046, %v2089
    %v2122 = vadd.f32 %v2047, %v2090
    %v2123 = vadd.f32 %v2048, %v2091
    %v2124 = vadd.f32 %v2049, %v2092
    %v2125 = vadd.f32 %v2050, %v2093
    %v2126 = vadd.f32 %v2051, %v2094
    %v2127 = vadd.f32 %v2052, %v2095
    %v2128 = vadd.f32 %v2053, %v2096
    %v2129 = vadd.f32 %v2054, %v2097
    %v2130 = vadd.f32 %v2055, %v2098
    %v2131 = vadd.f32 %v2056, %v2099
    %v2132 = vadd.f32 %v2057, %v2100
    %2133 = vrot.lane.b32.xlu0 %v2101, 16
    %v2134 = vpop.permute.xlu0 %2133
    %2135 = vrot.lane.b32.xlu0 %v2103, 16
    %v2136 = vpop.permute.xlu0 %2135
    %2137 = vrot.lane.b32.xlu0 %v2105, 16
    %v2138 = vpop.permute.xlu0 %2137
    %2139 = vrot.lane.b32.xlu0 %v2107, 16
    %v2140 = vpop.permute.xlu0 %2139
    %2141 = vrot.lane.b32.xlu0 %v2109, 16
    %v2142 = vpop.permute.xlu0 %2141
    %2143 = vrot.lane.b32.xlu0 %v2111, 16
    %v2144 = vpop.permute.xlu0 %2143
    %2145 = vrot.lane.b32.xlu0 %v2113, 16
    %v2146 = vpop.permute.xlu0 %2145
    %2147 = vrot.lane.b32.xlu0 %v2115, 16
    %v2148 = vpop.permute.xlu0 %2147
    %2149 = vrot.lane.b32.xlu0 %v2117, 16
    %v2150 = vpop.permute.xlu0 %2149
    %2151 = vrot.lane.b32.xlu0 %v2119, 16
    %v2152 = vpop.permute.xlu0 %2151
    %2153 = vrot.lane.b32.xlu0 %v2121, 16
    %v2154 = vpop.permute.xlu0 %2153
    %2155 = vrot.lane.b32.xlu0 %v2123, 16
    %v2156 = vpop.permute.xlu0 %2155
    %2157 = vrot.lane.b32.xlu0 %v2125, 16
    %v2158 = vpop.permute.xlu0 %2157
    %2159 = vrot.lane.b32.xlu0 %v2127, 16
    %v2160 = vpop.permute.xlu0 %2159
    %2161 = vrot.lane.b32.xlu0 %v2129, 16
    %v2162 = vpop.permute.xlu0 %2161
    %2163 = vrot.lane.b32.xlu0 %v2131, 16
    %v2164 = vpop.permute.xlu0 %2163
    %2165 = vrot.lane.b32.xlu0 %v2102, 16
    %v2166 = vpop.permute.xlu0 %2165
    %2167 = vrot.lane.b32.xlu0 %v2104, 16
    %v2168 = vpop.permute.xlu0 %2167
    %2169 = vrot.lane.b32.xlu0 %v2106, 16
    %v2170 = vpop.permute.xlu0 %2169
    %2171 = vrot.lane.b32.xlu0 %v2108, 16
    %v2172 = vpop.permute.xlu0 %2171
    %2173 = vrot.lane.b32.xlu0 %v2110, 16
    %v2174 = vpop.permute.xlu0 %2173
    %2175 = vrot.lane.b32.xlu0 %v2112, 16
    %v2176 = vpop.permute.xlu0 %2175
    %2177 = vrot.lane.b32.xlu0 %v2114, 16
    %v2178 = vpop.permute.xlu0 %2177
    %2179 = vrot.lane.b32.xlu0 %v2116, 16
    %v2180 = vpop.permute.xlu0 %2179
    %2181 = vrot.lane.b32.xlu0 %v2118, 16
    %v2182 = vpop.permute.xlu0 %2181
    %2183 = vrot.lane.b32.xlu0 %v2120, 16
    %v2184 = vpop.permute.xlu0 %2183
    %2185 = vrot.lane.b32.xlu0 %v2122, 16
    %v2186 = vpop.permute.xlu0 %2185
    %2187 = vrot.lane.b32.xlu0 %v2124, 16
    %v2188 = vpop.permute.xlu0 %2187
    %2189 = vrot.lane.b32.xlu0 %v2126, 16
    %v2190 = vpop.permute.xlu0 %2189
    %2191 = vrot.lane.b32.xlu0 %v2128, 16
    %v2192 = vpop.permute.xlu0 %2191
    %2193 = vrot.lane.b32.xlu0 %v2130, 16
    %v2194 = vpop.permute.xlu0 %2193
    %2195 = vrot.lane.b32.xlu0 %v2132, 16
    %v2196 = vpop.permute.xlu0 %2195
    %vm2197 = vcmp.lt.s32.totalorder %v1852, 16
    %v2198 = vsel %vm2197, %v2134, %v2166
    %v2199 = vsel %vm2197, %v2136, %v2168
    %v2200 = vsel %vm2197, %v2138, %v2170
    %v2201 = vsel %vm2197, %v2140, %v2172
    %v2202 = vsel %vm2197, %v2142, %v2174
    %v2203 = vsel %vm2197, %v2144, %v2176
    %v2204 = vsel %vm2197, %v2146, %v2178
    %v2205 = vsel %vm2197, %v2148, %v2180
    %v2206 = vsel %vm2197, %v2150, %v2182
    %v2207 = vsel %vm2197, %v2152, %v2184
    %v2208 = vsel %vm2197, %v2154, %v2186
    %v2209 = vsel %vm2197, %v2156, %v2188
    %v2210 = vsel %vm2197, %v2158, %v2190
    %v2211 = vsel %vm2197, %v2160, %v2192
    %v2212 = vsel %vm2197, %v2162, %v2194
    %v2213 = vsel %vm2197, %v2164, %v2196
    %v2214 = vsel %vm2197, %v2166, %v2134
    %v2215 = vsel %vm2197, %v2168, %v2136
    %v2216 = vsel %vm2197, %v2170, %v2138
    %v2217 = vsel %vm2197, %v2172, %v2140
    %v2218 = vsel %vm2197, %v2174, %v2142
    %v2219 = vsel %vm2197, %v2176, %v2144
    %v2220 = vsel %vm2197, %v2178, %v2146
    %v2221 = vsel %vm2197, %v2180, %v2148
    %v2222 = vsel %vm2197, %v2182, %v2150
    %v2223 = vsel %vm2197, %v2184, %v2152
    %v2224 = vsel %vm2197, %v2186, %v2154
    %v2225 = vsel %vm2197, %v2188, %v2156
    %v2226 = vsel %vm2197, %v2190, %v2158
    %v2227 = vsel %vm2197, %v2192, %v2160
    %v2228 = vsel %vm2197, %v2194, %v2162
    %v2229 = vsel %vm2197, %v2196, %v2164
    %2230 = vrot.lane.b32.xlu0 %v2101, 112
    %v2231 = vpop.permute.xlu0 %2230
    %2232 = vrot.lane.b32.xlu0 %v2103, 112
    %v2233 = vpop.permute.xlu0 %2232
    %2234 = vrot.lane.b32.xlu0 %v2105, 112
    %v2235 = vpop.permute.xlu0 %2234
    %2236 = vrot.lane.b32.xlu0 %v2107, 112
    %v2237 = vpop.permute.xlu0 %2236
    %2238 = vrot.lane.b32.xlu0 %v2109, 112
    %v2239 = vpop.permute.xlu0 %2238
    %2240 = vrot.lane.b32.xlu0 %v2111, 112
    %v2241 = vpop.permute.xlu0 %2240
    %2242 = vrot.lane.b32.xlu0 %v2113, 112
    %v2243 = vpop.permute.xlu0 %2242
    %2244 = vrot.lane.b32.xlu0 %v2115, 112
    %v2245 = vpop.permute.xlu0 %2244
    %2246 = vrot.lane.b32.xlu0 %v2117, 112
    %v2247 = vpop.permute.xlu0 %2246
    %2248 = vrot.lane.b32.xlu0 %v2119, 112
    %v2249 = vpop.permute.xlu0 %2248
    %2250 = vrot.lane.b32.xlu0 %v2121, 112
    %v2251 = vpop.permute.xlu0 %2250
    %2252 = vrot.lane.b32.xlu0 %v2123, 112
    %v2253 = vpop.permute.xlu0 %2252
    %2254 = vrot.lane.b32.xlu0 %v2125, 112
    %v2255 = vpop.permute.xlu0 %2254
    %2256 = vrot.lane.b32.xlu0 %v2127, 112
    %v2257 = vpop.permute.xlu0 %2256
    %2258 = vrot.lane.b32.xlu0 %v2129, 112
    %v2259 = vpop.permute.xlu0 %2258
    %2260 = vrot.lane.b32.xlu0 %v2131, 112
    %v2261 = vpop.permute.xlu0 %2260
    %2262 = vrot.lane.b32.xlu0 %v2102, 112
    %v2263 = vpop.permute.xlu0 %2262
    %2264 = vrot.lane.b32.xlu0 %v2104, 112
    %v2265 = vpop.permute.xlu0 %2264
    %2266 = vrot.lane.b32.xlu0 %v2106, 112
    %v2267 = vpop.permute.xlu0 %2266
    %2268 = vrot.lane.b32.xlu0 %v2108, 112
    %v2269 = vpop.permute.xlu0 %2268
    %2270 = vrot.lane.b32.xlu0 %v2110, 112
    %v2271 = vpop.permute.xlu0 %2270
    %2272 = vrot.lane.b32.xlu0 %v2112, 112
    %v2273 = vpop.permute.xlu0 %2272
    %2274 = vrot.lane.b32.xlu0 %v2114, 112
    %v2275 = vpop.permute.xlu0 %2274
    %2276 = vrot.lane.b32.xlu0 %v2116, 112
    %v2277 = vpop.permute.xlu0 %2276
    %2278 = vrot.lane.b32.xlu0 %v2118, 112
    %v2279 = vpop.permute.xlu0 %2278
    %2280 = vrot.lane.b32.xlu0 %v2120, 112
    %v2281 = vpop.permute.xlu0 %2280
    %2282 = vrot.lane.b32.xlu0 %v2122, 112
    %v2283 = vpop.permute.xlu0 %2282
    %2284 = vrot.lane.b32.xlu0 %v2124, 112
    %v2285 = vpop.permute.xlu0 %2284
    %2286 = vrot.lane.b32.xlu0 %v2126, 112
    %v2287 = vpop.permute.xlu0 %2286
    %2288 = vrot.lane.b32.xlu0 %v2128, 112
    %v2289 = vpop.permute.xlu0 %2288
    %2290 = vrot.lane.b32.xlu0 %v2130, 112
    %v2291 = vpop.permute.xlu0 %2290
    %2292 = vrot.lane.b32.xlu0 %v2132, 112
    %v2293 = vpop.permute.xlu0 %2292
    %vm2294 = vcmp.lt.s32.totalorder %v1852, 112
    %v2295 = vsel %vm2294, %v2231, %v2263
    %v2296 = vsel %vm2294, %v2233, %v2265
    %v2297 = vsel %vm2294, %v2235, %v2267
    %v2298 = vsel %vm2294, %v2237, %v2269
    %v2299 = vsel %vm2294, %v2239, %v2271
    %v2300 = vsel %vm2294, %v2241, %v2273
    %v2301 = vsel %vm2294, %v2243, %v2275
    %v2302 = vsel %vm2294, %v2245, %v2277
    %v2303 = vsel %vm2294, %v2247, %v2279
    %v2304 = vsel %vm2294, %v2249, %v2281
    %v2305 = vsel %vm2294, %v2251, %v2283
    %v2306 = vsel %vm2294, %v2253, %v2285
    %v2307 = vsel %vm2294, %v2255, %v2287
    %v2308 = vsel %vm2294, %v2257, %v2289
    %v2309 = vsel %vm2294, %v2259, %v2291
    %v2310 = vsel %vm2294, %v2261, %v2293
    %v2311 = vsel %vm2294, %v2263, %v2231
    %v2312 = vsel %vm2294, %v2265, %v2233
    %v2313 = vsel %vm2294, %v2267, %v2235
    %v2314 = vsel %vm2294, %v2269, %v2237
    %v2315 = vsel %vm2294, %v2271, %v2239
    %v2316 = vsel %vm2294, %v2273, %v2241
    %v2317 = vsel %vm2294, %v2275, %v2243
    %v2318 = vsel %vm2294, %v2277, %v2245
    %v2319 = vsel %vm2294, %v2279, %v2247
    %v2320 = vsel %vm2294, %v2281, %v2249
    %v2321 = vsel %vm2294, %v2283, %v2251
    %v2322 = vsel %vm2294, %v2285, %v2253
    %v2323 = vsel %vm2294, %v2287, %v2255
    %v2324 = vsel %vm2294, %v2289, %v2257
    %v2325 = vsel %vm2294, %v2291, %v2259
    %v2326 = vsel %vm2294, %v2293, %v2261
    %v2328 = vlaneseq
    %v2329 = vshrl.u32 %v2328, 7
    %v2330 = vsub.s32 0, %v2329
    %v2331 = vrot.slane %v80, %v2330
    %v2332 = vlaneseq
    %v2333 = vshrl.u32 %v2332, 7
    %v2334 = vsub.s32 1, %v2333
    %v2335 = vrot.slane %v80, %v2334
    %v2338 = vmul.f32 %v2331, %v2214
    %v2339 = vmul.f32 %v2335, %v2198
    %v2340 = vmul.f32 %v2331, %v2215
    %v2341 = vmul.f32 %v2335, %v2199
    %v2342 = vmul.f32 %v2331, %v2216
    %v2343 = vmul.f32 %v2335, %v2200
    %v2344 = vmul.f32 %v2331, %v2217
    %v2345 = vmul.f32 %v2335, %v2201
    %v2346 = vmul.f32 %v2331, %v2218
    %v2347 = vmul.f32 %v2335, %v2202
    %v2348 = vmul.f32 %v2331, %v2219
    %v2349 = vmul.f32 %v2335, %v2203
    %v2350 = vmul.f32 %v2331, %v2220
    %v2351 = vmul.f32 %v2335, %v2204
    %v2352 = vmul.f32 %v2331, %v2221
    %v2353 = vmul.f32 %v2335, %v2205
    %v2354 = vmul.f32 %v2331, %v2222
    %v2355 = vmul.f32 %v2335, %v2206
    %v2356 = vmul.f32 %v2331, %v2223
    %v2357 = vmul.f32 %v2335, %v2207
    %v2358 = vmul.f32 %v2331, %v2224
    %v2359 = vmul.f32 %v2335, %v2208
    %v2360 = vmul.f32 %v2331, %v2225
    %v2361 = vmul.f32 %v2335, %v2209
    %v2362 = vmul.f32 %v2331, %v2226
    %v2363 = vmul.f32 %v2335, %v2210
    %v2364 = vmul.f32 %v2331, %v2227
    %v2365 = vmul.f32 %v2335, %v2211
    %v2366 = vmul.f32 %v2331, %v2228
    %v2367 = vmul.f32 %v2335, %v2212
    %v2368 = vmul.f32 %v2331, %v2229
    %v2369 = vmul.f32 %v2335, %v2213
    %v2370 = vadd.f32 %v2101, %v2338
    %v2371 = vadd.f32 %v2102, %v2339
    %v2372 = vadd.f32 %v2103, %v2340
    %v2373 = vadd.f32 %v2104, %v2341
    %v2374 = vadd.f32 %v2105, %v2342
    %v2375 = vadd.f32 %v2106, %v2343
    %v2376 = vadd.f32 %v2107, %v2344
    %v2377 = vadd.f32 %v2108, %v2345
    %v2378 = vadd.f32 %v2109, %v2346
    %v2379 = vadd.f32 %v2110, %v2347
    %v2380 = vadd.f32 %v2111, %v2348
    %v2381 = vadd.f32 %v2112, %v2349
    %v2382 = vadd.f32 %v2113, %v2350
    %v2383 = vadd.f32 %v2114, %v2351
    %v2384 = vadd.f32 %v2115, %v2352
    %v2385 = vadd.f32 %v2116, %v2353
    %v2386 = vadd.f32 %v2117, %v2354
    %v2387 = vadd.f32 %v2118, %v2355
    %v2388 = vadd.f32 %v2119, %v2356
    %v2389 = vadd.f32 %v2120, %v2357
    %v2390 = vadd.f32 %v2121, %v2358
    %v2391 = vadd.f32 %v2122, %v2359
    %v2392 = vadd.f32 %v2123, %v2360
    %v2393 = vadd.f32 %v2124, %v2361
    %v2394 = vadd.f32 %v2125, %v2362
    %v2395 = vadd.f32 %v2126, %v2363
    %v2396 = vadd.f32 %v2127, %v2364
    %v2397 = vadd.f32 %v2128, %v2365
    %v2398 = vadd.f32 %v2129, %v2366
    %v2399 = vadd.f32 %v2130, %v2367
    %v2400 = vadd.f32 %v2131, %v2368
    %v2401 = vadd.f32 %v2132, %v2369
    %v2403 = vlaneseq
    %v2404 = vshrl.u32 %v2403, 7
    %v2405 = vsub.s32 0, %v2404
    %v2406 = vrot.slane %v82, %v2405
    %v2407 = vlaneseq
    %v2408 = vshrl.u32 %v2407, 7
    %v2409 = vsub.s32 1, %v2408
    %v2410 = vrot.slane %v82, %v2409
    %v2413 = vmul.f32 %v2406, %v2295
    %v2414 = vmul.f32 %v2410, %v2311
    %v2415 = vmul.f32 %v2406, %v2296
    %v2416 = vmul.f32 %v2410, %v2312
    %v2417 = vmul.f32 %v2406, %v2297
    %v2418 = vmul.f32 %v2410, %v2313
    %v2419 = vmul.f32 %v2406, %v2298
    %v2420 = vmul.f32 %v2410, %v2314
    %v2421 = vmul.f32 %v2406, %v2299
    %v2422 = vmul.f32 %v2410, %v2315
    %v2423 = vmul.f32 %v2406, %v2300
    %v2424 = vmul.f32 %v2410, %v2316
    %v2425 = vmul.f32 %v2406, %v2301
    %v2426 = vmul.f32 %v2410, %v2317
    %v2427 = vmul.f32 %v2406, %v2302
    %v2428 = vmul.f32 %v2410, %v2318
    %v2429 = vmul.f32 %v2406, %v2303
    %v2430 = vmul.f32 %v2410, %v2319
    %v2431 = vmul.f32 %v2406, %v2304
    %v2432 = vmul.f32 %v2410, %v2320
    %v2433 = vmul.f32 %v2406, %v2305
    %v2434 = vmul.f32 %v2410, %v2321
    %v2435 = vmul.f32 %v2406, %v2306
    %v2436 = vmul.f32 %v2410, %v2322
    %v2437 = vmul.f32 %v2406, %v2307
    %v2438 = vmul.f32 %v2410, %v2323
    %v2439 = vmul.f32 %v2406, %v2308
    %v2440 = vmul.f32 %v2410, %v2324
    %v2441 = vmul.f32 %v2406, %v2309
    %v2442 = vmul.f32 %v2410, %v2325
    %v2443 = vmul.f32 %v2406, %v2310
    %v2444 = vmul.f32 %v2410, %v2326
    %v2445 = vadd.f32 %v2370, %v2413
    %v2446 = vadd.f32 %v2371, %v2414
    %v2447 = vadd.f32 %v2372, %v2415
    %v2448 = vadd.f32 %v2373, %v2416
    %v2449 = vadd.f32 %v2374, %v2417
    %v2450 = vadd.f32 %v2375, %v2418
    %v2451 = vadd.f32 %v2376, %v2419
    %v2452 = vadd.f32 %v2377, %v2420
    %v2453 = vadd.f32 %v2378, %v2421
    %v2454 = vadd.f32 %v2379, %v2422
    %v2455 = vadd.f32 %v2380, %v2423
    %v2456 = vadd.f32 %v2381, %v2424
    %v2457 = vadd.f32 %v2382, %v2425
    %v2458 = vadd.f32 %v2383, %v2426
    %v2459 = vadd.f32 %v2384, %v2427
    %v2460 = vadd.f32 %v2385, %v2428
    %v2461 = vadd.f32 %v2386, %v2429
    %v2462 = vadd.f32 %v2387, %v2430
    %v2463 = vadd.f32 %v2388, %v2431
    %v2464 = vadd.f32 %v2389, %v2432
    %v2465 = vadd.f32 %v2390, %v2433
    %v2466 = vadd.f32 %v2391, %v2434
    %v2467 = vadd.f32 %v2392, %v2435
    %v2468 = vadd.f32 %v2393, %v2436
    %v2469 = vadd.f32 %v2394, %v2437
    %v2470 = vadd.f32 %v2395, %v2438
    %v2471 = vadd.f32 %v2396, %v2439
    %v2472 = vadd.f32 %v2397, %v2440
    %v2473 = vadd.f32 %v2398, %v2441
    %v2474 = vadd.f32 %v2399, %v2442
    %v2475 = vadd.f32 %v2400, %v2443
    %v2476 = vadd.f32 %v2401, %v2444
    %v2478 = vlaneseq
    %v2479 = vshrl.u32 %v2478, 7
    %v2480 = vsub.s32 0, %v2479
    %v2481 = vrot.slane %v84, %v2480
    %v2482 = vlaneseq
    %v2483 = vshrl.u32 %v2482, 7
    %v2484 = vsub.s32 1, %v2483
    %v2485 = vrot.slane %v84, %v2484
    %v2488 = vmul.f32 %v2445, %v2481
    %v2489 = vmul.f32 %v2446, %v2485
    %v2490 = vmul.f32 %v2447, %v2481
    %v2491 = vmul.f32 %v2448, %v2485
    %v2492 = vmul.f32 %v2449, %v2481
    %v2493 = vmul.f32 %v2450, %v2485
    %v2494 = vmul.f32 %v2451, %v2481
    %v2495 = vmul.f32 %v2452, %v2485
    %v2496 = vmul.f32 %v2453, %v2481
    %v2497 = vmul.f32 %v2454, %v2485
    %v2498 = vmul.f32 %v2455, %v2481
    %v2499 = vmul.f32 %v2456, %v2485
    %v2500 = vmul.f32 %v2457, %v2481
    %v2501 = vmul.f32 %v2458, %v2485
    %v2502 = vmul.f32 %v2459, %v2481
    %v2503 = vmul.f32 %v2460, %v2485
    %v2504 = vmul.f32 %v2461, %v2481
    %v2505 = vmul.f32 %v2462, %v2485
    %v2506 = vmul.f32 %v2463, %v2481
    %v2507 = vmul.f32 %v2464, %v2485
    %v2508 = vmul.f32 %v2465, %v2481
    %v2509 = vmul.f32 %v2466, %v2485
    %v2510 = vmul.f32 %v2467, %v2481
    %v2511 = vmul.f32 %v2468, %v2485
    %v2512 = vmul.f32 %v2469, %v2481
    %v2513 = vmul.f32 %v2470, %v2485
    %v2514 = vmul.f32 %v2471, %v2481
    %v2515 = vmul.f32 %v2472, %v2485
    %v2516 = vmul.f32 %v2473, %v2481
    %v2517 = vmul.f32 %v2474, %v2485
    %v2518 = vmul.f32 %v2475, %v2481
    %v2519 = vmul.f32 %v2476, %v2485
    %v2520 = vadd.f32 %v1678, %v2488
    %v2521 = vadd.f32 %v1680, %v2489
    %v2522 = vadd.f32 %v1685, %v2490
    %v2523 = vadd.f32 %v1687, %v2491
    %v2524 = vadd.f32 %v1692, %v2492
    %v2525 = vadd.f32 %v1694, %v2493
    %v2526 = vadd.f32 %v1699, %v2494
    %v2527 = vadd.f32 %v1701, %v2495
    %v2528 = vadd.f32 %v1706, %v2496
    %v2529 = vadd.f32 %v1708, %v2497
    %v2530 = vadd.f32 %v1713, %v2498
    %v2531 = vadd.f32 %v1715, %v2499
    %v2532 = vadd.f32 %v1720, %v2500
    %v2533 = vadd.f32 %v1722, %v2501
    %v2534 = vadd.f32 %v1727, %v2502
    %v2535 = vadd.f32 %v1729, %v2503
    %v2536 = vadd.f32 %v1734, %v2504
    %v2537 = vadd.f32 %v1736, %v2505
    %v2538 = vadd.f32 %v1741, %v2506
    %v2539 = vadd.f32 %v1743, %v2507
    %v2540 = vadd.f32 %v1748, %v2508
    %v2541 = vadd.f32 %v1750, %v2509
    %v2542 = vadd.f32 %v1755, %v2510
    %v2543 = vadd.f32 %v1757, %v2511
    %v2544 = vadd.f32 %v1762, %v2512
    %v2545 = vadd.f32 %v1764, %v2513
    %v2546 = vadd.f32 %v1769, %v2514
    %v2547 = vadd.f32 %v1771, %v2515
    %v2548 = vadd.f32 %v1776, %v2516
    %v2549 = vadd.f32 %v1778, %v2517
    %v2550 = vadd.f32 %v1783, %v2518
    %v2551 = vadd.f32 %v1785, %v2519
    %v2552 = vxor.u32 %v2520, 2147483648
    %v2553 = vxor.u32 %v2521, 2147483648
    %v2554 = vxor.u32 %v2522, 2147483648
    %v2555 = vxor.u32 %v2523, 2147483648
    %v2556 = vxor.u32 %v2524, 2147483648
    %v2557 = vxor.u32 %v2525, 2147483648
    %v2558 = vxor.u32 %v2526, 2147483648
    %v2559 = vxor.u32 %v2527, 2147483648
    %v2560 = vxor.u32 %v2528, 2147483648
    %v2561 = vxor.u32 %v2529, 2147483648
    %v2562 = vxor.u32 %v2530, 2147483648
    %v2563 = vxor.u32 %v2531, 2147483648
    %v2564 = vxor.u32 %v2532, 2147483648
    %v2565 = vxor.u32 %v2533, 2147483648
    %v2566 = vxor.u32 %v2534, 2147483648
    %v2567 = vxor.u32 %v2535, 2147483648
    %v2568 = vxor.u32 %v2536, 2147483648
    %v2569 = vxor.u32 %v2537, 2147483648
    %v2570 = vxor.u32 %v2538, 2147483648
    %v2571 = vxor.u32 %v2539, 2147483648
    %v2572 = vxor.u32 %v2540, 2147483648
    %v2573 = vxor.u32 %v2541, 2147483648
    %v2574 = vxor.u32 %v2542, 2147483648
    %v2575 = vxor.u32 %v2543, 2147483648
    %v2576 = vxor.u32 %v2544, 2147483648
    %v2577 = vxor.u32 %v2545, 2147483648
    %v2578 = vxor.u32 %v2546, 2147483648
    %v2579 = vxor.u32 %v2547, 2147483648
    %v2580 = vxor.u32 %v2548, 2147483648
    %v2581 = vxor.u32 %v2549, 2147483648
    %v2582 = vxor.u32 %v2550, 2147483648
    %v2583 = vxor.u32 %v2551, 2147483648
    %v2584 = vmul.f32 %v2552, 1.442695
    %v2585 = vpow.pop %v2584
    %v2586 = vmul.f32 %v2553, 1.442695
    %v2587 = vpow.pop %v2586
    %v2588 = vmul.f32 %v2554, 1.442695
    %v2589 = vpow.pop %v2588
    %v2590 = vmul.f32 %v2555, 1.442695
    %v2591 = vpow.pop %v2590
    %v2592 = vmul.f32 %v2556, 1.442695
    %v2593 = vpow.pop %v2592
    %v2594 = vmul.f32 %v2557, 1.442695
    %v2595 = vpow.pop %v2594
    %v2596 = vmul.f32 %v2558, 1.442695
    %v2597 = vpow.pop %v2596
    %v2598 = vmul.f32 %v2559, 1.442695
    %v2599 = vpow.pop %v2598
    %v2600 = vmul.f32 %v2560, 1.442695
    %v2601 = vpow.pop %v2600
    %v2602 = vmul.f32 %v2561, 1.442695
    %v2603 = vpow.pop %v2602
    %v2604 = vmul.f32 %v2562, 1.442695
    %v2605 = vpow.pop %v2604
    %v2606 = vmul.f32 %v2563, 1.442695
    %v2607 = vpow.pop %v2606
    %v2608 = vmul.f32 %v2564, 1.442695
    %v2609 = vpow.pop %v2608
    %v2610 = vmul.f32 %v2565, 1.442695
    %v2611 = vpow.pop %v2610
    %v2612 = vmul.f32 %v2566, 1.442695
    %v2613 = vpow.pop %v2612
    %v2614 = vmul.f32 %v2567, 1.442695
    %v2615 = vpow.pop %v2614
    %v2616 = vmul.f32 %v2568, 1.442695
    %v2617 = vpow.pop %v2616
    %v2618 = vmul.f32 %v2569, 1.442695
    %v2619 = vpow.pop %v2618
    %v2620 = vmul.f32 %v2570, 1.442695
    %v2621 = vpow.pop %v2620
    %v2622 = vmul.f32 %v2571, 1.442695
    %v2623 = vpow.pop %v2622
    %v2624 = vmul.f32 %v2572, 1.442695
    %v2625 = vpow.pop %v2624
    %v2626 = vmul.f32 %v2573, 1.442695
    %v2627 = vpow.pop %v2626
    %v2628 = vmul.f32 %v2574, 1.442695
    %v2629 = vpow.pop %v2628
    %v2630 = vmul.f32 %v2575, 1.442695
    %v2631 = vpow.pop %v2630
    %v2632 = vmul.f32 %v2576, 1.442695
    %v2633 = vpow.pop %v2632
    %v2634 = vmul.f32 %v2577, 1.442695
    %v2635 = vpow.pop %v2634
    %v2636 = vmul.f32 %v2578, 1.442695
    %v2637 = vpow.pop %v2636
    %v2638 = vmul.f32 %v2579, 1.442695
    %v2639 = vpow.pop %v2638
    %v2640 = vmul.f32 %v2580, 1.442695
    %v2641 = vpow.pop %v2640
    %v2642 = vmul.f32 %v2581, 1.442695
    %v2643 = vpow.pop %v2642
    %v2644 = vmul.f32 %v2582, 1.442695
    %v2645 = vpow.pop %v2644
    %v2646 = vmul.f32 %v2583, 1.442695
    %v2647 = vpow.pop %v2646
    %v2648 = vadd.f32 %v2585, 1.0
    %v2649 = vadd.f32 %v2587, 1.0
    %v2650 = vadd.f32 %v2589, 1.0
    %v2651 = vadd.f32 %v2591, 1.0
    %v2652 = vadd.f32 %v2593, 1.0
    %v2653 = vadd.f32 %v2595, 1.0
    %v2654 = vadd.f32 %v2597, 1.0
    %v2655 = vadd.f32 %v2599, 1.0
    %v2656 = vadd.f32 %v2601, 1.0
    %v2657 = vadd.f32 %v2603, 1.0
    %v2658 = vadd.f32 %v2605, 1.0
    %v2659 = vadd.f32 %v2607, 1.0
    %v2660 = vadd.f32 %v2609, 1.0
    %v2661 = vadd.f32 %v2611, 1.0
    %v2662 = vadd.f32 %v2613, 1.0
    %v2663 = vadd.f32 %v2615, 1.0
    %v2664 = vadd.f32 %v2617, 1.0
    %v2665 = vadd.f32 %v2619, 1.0
    %v2666 = vadd.f32 %v2621, 1.0
    %v2667 = vadd.f32 %v2623, 1.0
    %v2668 = vadd.f32 %v2625, 1.0
    %v2669 = vadd.f32 %v2627, 1.0
    %v2670 = vadd.f32 %v2629, 1.0
    %v2671 = vadd.f32 %v2631, 1.0
    %v2672 = vadd.f32 %v2633, 1.0
    %v2673 = vadd.f32 %v2635, 1.0
    %v2674 = vadd.f32 %v2637, 1.0
    %v2675 = vadd.f32 %v2639, 1.0
    %v2676 = vadd.f32 %v2641, 1.0
    %v2677 = vadd.f32 %v2643, 1.0
    %v2678 = vadd.f32 %v2645, 1.0
    %v2679 = vadd.f32 %v2647, 1.0
    %v2680 = vrcp.pop %v2648
    %v2681 = vmul.f32 1.0, %v2680
    %v2682 = vrcp.pop %v2649
    %v2683 = vmul.f32 1.0, %v2682
    %v2684 = vrcp.pop %v2650
    %v2685 = vmul.f32 1.0, %v2684
    %v2686 = vrcp.pop %v2651
    %v2687 = vmul.f32 1.0, %v2686
    %v2688 = vrcp.pop %v2652
    %v2689 = vmul.f32 1.0, %v2688
    %v2690 = vrcp.pop %v2653
    %v2691 = vmul.f32 1.0, %v2690
    %v2692 = vrcp.pop %v2654
    %v2693 = vmul.f32 1.0, %v2692
    %v2694 = vrcp.pop %v2655
    %v2695 = vmul.f32 1.0, %v2694
    %v2696 = vrcp.pop %v2656
    %v2697 = vmul.f32 1.0, %v2696
    %v2698 = vrcp.pop %v2657
    %v2699 = vmul.f32 1.0, %v2698
    %v2700 = vrcp.pop %v2658
    %v2701 = vmul.f32 1.0, %v2700
    %v2702 = vrcp.pop %v2659
    %v2703 = vmul.f32 1.0, %v2702
    %v2704 = vrcp.pop %v2660
    %v2705 = vmul.f32 1.0, %v2704
    %v2706 = vrcp.pop %v2661
    %v2707 = vmul.f32 1.0, %v2706
    %v2708 = vrcp.pop %v2662
    %v2709 = vmul.f32 1.0, %v2708
    %v2710 = vrcp.pop %v2663
    %v2711 = vmul.f32 1.0, %v2710
    %v2712 = vrcp.pop %v2664
    %v2713 = vmul.f32 1.0, %v2712
    %v2714 = vrcp.pop %v2665
    %v2715 = vmul.f32 1.0, %v2714
    %v2716 = vrcp.pop %v2666
    %v2717 = vmul.f32 1.0, %v2716
    %v2718 = vrcp.pop %v2667
    %v2719 = vmul.f32 1.0, %v2718
    %v2720 = vrcp.pop %v2668
    %v2721 = vmul.f32 1.0, %v2720
    %v2722 = vrcp.pop %v2669
    %v2723 = vmul.f32 1.0, %v2722
    %v2724 = vrcp.pop %v2670
    %v2725 = vmul.f32 1.0, %v2724
    %v2726 = vrcp.pop %v2671
    %v2727 = vmul.f32 1.0, %v2726
    %v2728 = vrcp.pop %v2672
    %v2729 = vmul.f32 1.0, %v2728
    %v2730 = vrcp.pop %v2673
    %v2731 = vmul.f32 1.0, %v2730
    %v2732 = vrcp.pop %v2674
    %v2733 = vmul.f32 1.0, %v2732
    %v2734 = vrcp.pop %v2675
    %v2735 = vmul.f32 1.0, %v2734
    %v2736 = vrcp.pop %v2676
    %v2737 = vmul.f32 1.0, %v2736
    %v2738 = vrcp.pop %v2677
    %v2739 = vmul.f32 1.0, %v2738
    %v2740 = vrcp.pop %v2678
    %v2741 = vmul.f32 1.0, %v2740
    %v2742 = vrcp.pop %v2679
    %v2743 = vmul.f32 1.0, %v2742
    %v2744 = vmul.f32 %v85, %v2681
    %v2745 = vmul.f32 %v86, %v2683
    %v2746 = vmul.f32 %v87, %v2685
    %v2747 = vmul.f32 %v88, %v2687
    %v2748 = vmul.f32 %v89, %v2689
    %v2749 = vmul.f32 %v90, %v2691
    %v2750 = vmul.f32 %v91, %v2693
    %v2751 = vmul.f32 %v92, %v2695
    %v2752 = vmul.f32 %v93, %v2697
    %v2753 = vmul.f32 %v94, %v2699
    %v2754 = vmul.f32 %v95, %v2701
    %v2755 = vmul.f32 %v96, %v2703
    %v2756 = vmul.f32 %v97, %v2705
    %v2757 = vmul.f32 %v98, %v2707
    %v2758 = vmul.f32 %v99, %v2709
    %v2759 = vmul.f32 %v100, %v2711
    %v2760 = vmul.f32 %v101, %v2713
    %v2761 = vmul.f32 %v102, %v2715
    %v2762 = vmul.f32 %v103, %v2717
    %v2763 = vmul.f32 %v104, %v2719
    %v2764 = vmul.f32 %v105, %v2721
    %v2765 = vmul.f32 %v106, %v2723
    %v2766 = vmul.f32 %v107, %v2725
    %v2767 = vmul.f32 %v108, %v2727
    %v2768 = vmul.f32 %v109, %v2729
    %v2769 = vmul.f32 %v110, %v2731
    %v2770 = vmul.f32 %v111, %v2733
    %v2771 = vmul.f32 %v112, %v2735
    %v2772 = vmul.f32 %v113, %v2737
    %v2773 = vmul.f32 %v114, %v2739
    %v2774 = vmul.f32 %v115, %v2741
    %v2775 = vmul.f32 %v116, %v2743
    %2776 = vst [vmem:[#allocation7] sm:$0xff] %v2744
    %2777 = vst [vmem:[#allocation7 + $0x8] sm:$0xff] %v2745
    %2778 = vst [vmem:[#allocation7 + $0x10] sm:$0xff] %v2746
    %2779 = vst [vmem:[#allocation7 + $0x18] sm:$0xff] %v2747
    %2780 = vst [vmem:[#allocation7 + $0x20] sm:$0xff] %v2748
    %2781 = vst [vmem:[#allocation7 + $0x28] sm:$0xff] %v2749
    %2782 = vst [vmem:[#allocation7 + $0x30] sm:$0xff] %v2750
    %2783 = vst [vmem:[#allocation7 + $0x38] sm:$0xff] %v2751
    %2784 = vst [vmem:[#allocation7 + $0x40] sm:$0xff] %v2752
    %2785 = vst [vmem:[#allocation7 + $0x48] sm:$0xff] %v2753
    %2786 = vst [vmem:[#allocation7 + $0x50] sm:$0xff] %v2754
    %2787 = vst [vmem:[#allocation7 + $0x58] sm:$0xff] %v2755
    %2788 = vst [vmem:[#allocation7 + $0x60] sm:$0xff] %v2756
    %2789 = vst [vmem:[#allocation7 + $0x68] sm:$0xff] %v2757
    %2790 = vst [vmem:[#allocation7 + $0x70] sm:$0xff] %v2758
    %2791 = vst [vmem:[#allocation7 + $0x78] sm:$0xff] %v2759
    %2792 = vst [vmem:[#allocation7 + $0x80] sm:$0xff] %v2760
    %2793 = vst [vmem:[#allocation7 + $0x88] sm:$0xff] %v2761
    %2794 = vst [vmem:[#allocation7 + $0x90] sm:$0xff] %v2762
    %2795 = vst [vmem:[#allocation7 + $0x98] sm:$0xff] %v2763
    %2796 = vst [vmem:[#allocation7 + $0xa0] sm:$0xff] %v2764
    %2797 = vst [vmem:[#allocation7 + $0xa8] sm:$0xff] %v2765
    %2798 = vst [vmem:[#allocation7 + $0xb0] sm:$0xff] %v2766
    %2799 = vst [vmem:[#allocation7 + $0xb8] sm:$0xff] %v2767
    %2800 = vst [vmem:[#allocation7 + $0xc0] sm:$0xff] %v2768
    %2801 = vst [vmem:[#allocation7 + $0xc8] sm:$0xff] %v2769
    %2802 = vst [vmem:[#allocation7 + $0xd0] sm:$0xff] %v2770
    %2803 = vst [vmem:[#allocation7 + $0xd8] sm:$0xff] %v2771
    %2804 = vst [vmem:[#allocation7 + $0xe0] sm:$0xff] %v2772
    %2805 = vst [vmem:[#allocation7 + $0xe8] sm:$0xff] %v2773
    %2806 = vst [vmem:[#allocation7 + $0xf0] sm:$0xff] %v2774
    %2807 = vst [vmem:[#allocation7 + $0xf8] sm:$0xff] %v2775
    // Predicated region
    $region26: #{tpu_custom_call.1} parent=1 // pred_check
      _
    $region27: #{tpu_custom_call.1} parent=1 // pred_check_branch
      %2809 = sbr.rel (0) target = $region29
    $region28: #{tpu_custom_call.1} parent=1 // pred_region
      %s2811 = ssub.s32 4096, 4096
      %2812 = vsyncadd [#allocation4], %s2811
      %s2813 = sshll.u32 [#allocation7], 4
      %s2814 = int_to_ptr.vmem [resolvable:$true] %s2813
      %2819 = dma.vmem_to_hbm [thread:$0]  %s2814, 4096, %s4, [#allocation4], 256, 256, 16
    $region29: #{tpu_custom_call.1} parent=1 // pred_fallthru
      _
    // Predicated region
    $region30: #{tpu_custom_call.1} parent=1 // pred_check
      _
    $region31: #{tpu_custom_call.1} parent=1 // pred_check_branch
      %2821 = sbr.rel (0) target = $region33
    $region32: #{tpu_custom_call.1} parent=1 // pred_region
      %2822 = dma.done [#allocation4], 4096
    $region33: #{tpu_custom_call.1} parent=1 // pred_fallthru
      _
    %2823 = vsyncpa [#allocation3], 1
    %2824 = vsyncpa [#allocation6], 1
    %2825 = vsyncpa [#allocation4], 1

</llo_original>
